<compile_context>
chip_gen: v7x
topology: tpu7x:2x2x1
jax: 0.10.0
libtpu: 0.0.40
codegen_flags: <defaults>
</compile_context>

<pallas_src>
import functools

import jax
import jax.numpy as jnp
from jax.experimental import pallas as pl
from jax.experimental.pallas import tpu as pltpu


def _round_up(x, m):
    return (x + m - 1) // m * m


# ----------------------------------------------------------------------------
# Fused Pallas kernel: full DDPM reverse process in one invocation.
# Loop step s corresponds to diffusion timestep t = T - 1 - s (all per-step
# tables are pre-reordered into step order on the host).
# ----------------------------------------------------------------------------
def _reverse_loop_kernel(T, ncols, predict_epsilon, clip_denoised,
                         coefs_ref,   # SMEM (T*ncols,) f32 schedule scalars
                         x0_ref,      # VMEM (Bp, Fp) f32   hard-conditioned x_T
                         w_ref,       # VMEM (Fp, Fp) bf16  denoiser weight
                         temb_ref,    # VMEM (T, Fp)  f32   per-step time emb
                         noise_ref,   # VMEM (T, Bp, Fp) f32 per-step noise
                         cmask_ref,   # VMEM (Bp, Fp) f32   hard-cond mask
                         cvals_ref,   # VMEM (Bp, Fp) f32   hard-cond values
                         x_ref):      # out  (Bp, Fp) f32
    cmask = cmask_ref[...]
    cvals = cvals_ref[...]
    w = w_ref[...]                       # bf16, loaded once for all steps

    x = x0_ref[...]                      # (Bp, Fp) f32 carried in registers

    # Fully-unrolled reverse loop: T is a static Python int, so this is the
    # same straight-line code as lax.fori_loop(0, T, ..., unroll=True) but
    # with every slice/index static.
    for s in range(T):
        # --- self.model(x, t, context=None): linear denoiser on the MXU ---
        model_out = jnp.dot(x.astype(jnp.bfloat16), w,
                            preferred_element_type=jnp.float32)
        model_out = model_out + temb_ref[pl.ds(s, 1)]          # (1, Fp) bcast

        base = s * ncols
        c1 = coefs_ref[base + 0]      # posterior_mean_coef1[t]
        c2 = coefs_ref[base + 1]      # posterior_mean_coef2[t]
        std = coefs_ref[base + 2]     # 1[t>0] * exp(0.5 * posterior_log_var[t])

        # --- predict_start_from_noise ---
        if predict_epsilon:
            sr = coefs_ref[base + 3]      # sqrt_recip_alphas_cumprod[t]
            srm1 = coefs_ref[base + 4]    # sqrt_recipm1_alphas_cumprod[t]
            x_recon = sr * x - srm1 * model_out
        else:
            x_recon = model_out           # model predicts x0 directly

        # --- clip_denoised ---
        if clip_denoised:
            x_recon = jnp.clip(x_recon, -1.0, 1.0)

        # --- q_posterior mean + ddpm_sample_fn noise injection ---
        mean = c1 * x_recon + c2 * x
        x_next = mean + std * noise_ref[s]

        # --- apply_hard_conditioning (every step, on-chip) ---
        x = jnp.where(cmask > 0.5, cvals, x_next)

    x_ref[...] = x


def ddpm_reverse_pallas(coefs, x0, w, temb_steps, noise_steps, cmask, cvals,
                        *, T, ncols, predict_epsilon, clip_denoised):
    """Run the whole T-step reverse diffusion in one grid-less pallas_call.

    coefs:       (T*ncols,)  f32 step-ordered schedule scalars (SMEM)
    x0:          (Bp, Fp)    initial x_T (hard conds applied, padded)
    w:           (Fp, Fp)    bf16 denoiser weight (VMEM-resident)
    temb_steps:  (T, Fp)     per-step time embedding (VMEM-resident)
    noise_steps: (T, Bp, Fp) per-step Gaussian noise (VMEM-resident)
    cmask/cvals: (Bp, Fp)    hard-conditioning mask / values (VMEM-resident)
    """
    Bp, Fp = x0.shape
    kern = functools.partial(_reverse_loop_kernel, T, ncols,
                             predict_epsilon, clip_denoised)

    return pl.pallas_call(
        kern,
        out_shape=jax.ShapeDtypeStruct((Bp, Fp), jnp.float32),
        in_specs=[
            pl.BlockSpec(memory_space=pltpu.MemorySpace.SMEM),   # coefs
            pl.BlockSpec(memory_space=pltpu.MemorySpace.VMEM),   # x0
            pl.BlockSpec(memory_space=pltpu.MemorySpace.VMEM),   # W (bf16)
            pl.BlockSpec(memory_space=pltpu.MemorySpace.VMEM),   # temb
            pl.BlockSpec(memory_space=pltpu.MemorySpace.VMEM),   # noise
            pl.BlockSpec(memory_space=pltpu.MemorySpace.VMEM),   # cond mask
            pl.BlockSpec(memory_space=pltpu.MemorySpace.VMEM),   # cond vals
        ],
        out_specs=pl.BlockSpec(memory_space=pltpu.MemorySpace.VMEM),
    )(coefs, x0, w, temb_steps, noise_steps, cmask, cvals)


# ----------------------------------------------------------------------------
# GaussianDiffusionModel glue (schedule buffers, hard conditioning, sampling)
# ----------------------------------------------------------------------------
def exponential_beta_schedule(timesteps, beta_start=1e-4, beta_end=1.0):
    # exponentially increasing noise from t=0 to t=T (as in mpd)
    x = jnp.linspace(0.0, timesteps, timesteps)
    return (beta_start * (beta_end / beta_start) ** (x / timesteps)).astype(jnp.float32)


class GaussianDiffusionPallas:
    def __init__(self, state_dim, horizon, n_diffusion_steps=20,
                 clip_denoised=True, predict_epsilon=False, *, key):
        self.state_dim = state_dim
        self.horizon = horizon
        self.n_diffusion_steps = n_diffusion_steps
        self.clip_denoised = clip_denoised
        self.predict_epsilon = predict_epsilon

        T = n_diffusion_steps
        betas = exponential_beta_schedule(T)
        alphas = 1.0 - betas
        alphas_cumprod = jnp.cumprod(alphas)
        alphas_cumprod_prev = jnp.concatenate(
            [jnp.ones((1,), jnp.float32), alphas_cumprod[:-1]])
        self.betas = betas
        self.alphas_cumprod = alphas_cumprod
        self.alphas_cumprod_prev = alphas_cumprod_prev
        self.sqrt_alphas_cumprod = jnp.sqrt(alphas_cumprod)
        self.sqrt_one_minus_alphas_cumprod = jnp.sqrt(1.0 - alphas_cumprod)
        self.log_one_minus_alphas_cumprod = jnp.log(1.0 - alphas_cumprod)
        # NOTE: with beta_end=1.0, alphas_cumprod[-1]==0, so these are inf at
        # t=T-1; they are only consumed when predict_epsilon=True (same as the
        # PyTorch reference).
        self.sqrt_recip_alphas_cumprod = jnp.sqrt(1.0 / alphas_cumprod)
        self.sqrt_recipm1_alphas_cumprod = jnp.sqrt(1.0 / alphas_cumprod - 1.0)
        posterior_variance = betas * (1.0 - alphas_cumprod_prev) / (1.0 - alphas_cumprod)
        self.posterior_variance = posterior_variance
        self.posterior_log_variance_clipped = jnp.log(
            jnp.maximum(posterior_variance, 1e-20))
        self.posterior_mean_coef1 = (betas * jnp.sqrt(alphas_cumprod_prev)
                                     / (1.0 - alphas_cumprod))
        self.posterior_mean_coef2 = ((1.0 - alphas_cumprod_prev) * jnp.sqrt(alphas)
                                     / (1.0 - alphas_cumprod))

        # schedule-time constant: 1[t>0] * exp(0.5 * log_var[t])  (no in-kernel exp)
        t_arr = jnp.arange(T)
        self.posterior_std_masked = ((t_arr > 0).astype(jnp.float32)
                                     * jnp.exp(0.5 * self.posterior_log_variance_clipped))

        # synthetic inner denoiser: model(x, t) = flatten(x) @ W + t_emb[t]
        F = horizon * state_dim
        Fp = _round_up(max(F, 128), 128)          # lane-dense feature dim
        self.F, self.Fp = F, Fp
        kw, ke = jax.random.split(key)
        self.W = 0.02 * jax.random.normal(kw, (F, F), jnp.float32)
        self.t_emb = 0.1 * jax.random.normal(ke, (T, F), jnp.float32)
        # bf16, zero-padded weight: padded rows/cols stay exactly zero, so the
        # first F output columns are never contaminated by padded lanes.
        self.W_pad = (jnp.zeros((Fp, Fp), jnp.bfloat16)
                      .at[:F, :F].set(self.W.astype(jnp.bfloat16)))

        # reorder everything into step order: step s -> timestep T-1-s
        ts = jnp.arange(T - 1, -1, -1)
        self.temb_steps = (jnp.zeros((T, Fp), jnp.float32)
                           .at[:, :F].set(self.t_emb[ts]))

        cols = [self.posterior_mean_coef1[ts],
                self.posterior_mean_coef2[ts],
                self.posterior_std_masked[ts]]
        if predict_epsilon:
            cols += [self.sqrt_recip_alphas_cumprod[ts],
                     self.sqrt_recipm1_alphas_cumprod[ts]]
        self.ncols = len(cols)
        self.coefs = jnp.stack(cols, axis=1).reshape(-1).astype(jnp.float32)

        self._jit_reverse = jax.jit(functools.partial(
            ddpm_reverse_pallas, T=T, ncols=self.ncols,
            predict_epsilon=self.predict_epsilon,
            clip_denoised=self.clip_denoised))

    # ---- hard conditioning -------------------------------------------------
    def apply_hard_conditioning(self, x, hard_conds):
        # hard_conds: {time_index: (B, D) state}
        for ti, state in hard_conds.items():
            x = x.at[:, ti, :].set(state)
        return x

    def _hard_cond_mask_vals(self, B, Bp, hard_conds):
        D, Fp = self.state_dim, self.Fp
        cmask = jnp.zeros((Bp, Fp), jnp.float32)
        cvals = jnp.zeros((Bp, Fp), jnp.float32)
        for ti, state in hard_conds.items():
            lo = ti * D
            cmask = cmask.at[:B, lo:lo + D].set(1.0)
            cvals = cvals.at[:B, lo:lo + D].set(state.astype(jnp.float32))
        return cmask, cvals

    # ---- sampling ----------------------------------------------------------
    def p_sample_loop(self, shape, hard_conds, *, key):
        """Mirrors GaussianDiffusionModel.p_sample_loop with ddpm_sample_fn."""
        B, H, D = shape
        assert H == self.horizon and D == self.state_dim
        T, F, Fp = self.n_diffusion_steps, self.F, self.Fp
        Bp = max(_round_up(B, 8), 8)       # f32 sublane tile (and MXU rows)

        k0, kn = jax.random.split(key)
        x = jax.random.normal(k0, shape, jnp.float32)
        x = self.apply_hard_conditioning(x, hard_conds)
        x0 = jnp.zeros((Bp, Fp), jnp.float32).at[:B, :F].set(x.reshape(B, F))

        # all per-step Gaussian noise up front, resident in VMEM for the
        # fused kernel (padded rows/lanes are exactly zero)
        noise = jax.random.normal(kn, (T, B, H, D), jnp.float32)
        noise_p = (jnp.zeros((T, Bp, Fp), jnp.float32)
                   .at[:, :B, :F].set(noise.reshape(T, B, F)))

        cmask, cvals = self._hard_cond_mask_vals(B, Bp, hard_conds)

        out = self._jit_reverse(self.coefs, x0, self.W_pad, self.temb_steps,
                                noise_p, cmask, cvals)
        return out[:B, :F].reshape(B, H, D)

    def conditional_sample(self, hard_conds, horizon=None, batch_size=1, *, key):
        horizon = horizon or self.horizon
        shape = (batch_size, horizon, self.state_dim)
        return self.p_sample_loop(shape, hard_conds, key=key)

    # TODO(synk): ddim_sample, p_losses (MultivariateNormal KL), loss_fn and
    # context_model are not on the sampling hot path and are left unimplemented.


# ----------------------------------------------------------------------------
if __name__ == "__main__":
    B, H, D = 2, 8, 4          # batch, horizon, state_dim  (F = 32 -> padded to 128)
    T = 20                     # n_diffusion_steps

    root = jax.random.PRNGKey(0)
    k_model, k_cond, k_sample = jax.random.split(root, 3)

    gdm = GaussianDiffusionPallas(state_dim=D, horizon=H, n_diffusion_steps=T,
                                  clip_denoised=True, predict_epsilon=False,
                                  key=k_model)

    # hard conditions: pin the first waypoint of every trajectory
    start_state = jax.random.normal(k_cond, (B, D), jnp.float32)
    hard_conds = {0: start_state}

    samples = gdm.conditional_sample(hard_conds, batch_size=B, key=k_sample)
    samples = jax.block_until_ready(samples)

    assert samples.shape == (B, H, D)
    assert bool(jnp.all(jnp.isfinite(samples)))
    # pinned waypoint must be exactly the conditioned state
    assert bool(jnp.allclose(samples[:, 0, :], start_state))
    print("KERNEL_OK")
</pallas_src>

<mosaic_0001>
module attributes {stable_mosaic.version = 11 : i64} {
  func.func @_reverse_loop_kernel(%arg0: memref<60xf32, #tpu.memory_space<smem>>, %arg1: memref<8x128xf32, #tpu.memory_space<vmem>>, %arg2: memref<128x128xbf16, #tpu.memory_space<vmem>>, %arg3: memref<20x128xf32, #tpu.memory_space<vmem>>, %arg4: memref<20x8x128xf32, #tpu.memory_space<vmem>>, %arg5: memref<8x128xf32, #tpu.memory_space<vmem>>, %arg6: memref<8x128xf32, #tpu.memory_space<vmem>>, %arg7: memref<8x128xf32, #tpu.memory_space<vmem>>) attributes {dimension_semantics = [], scalar_prefetch = 0 : i64, scratch_operands = 0 : i64, tpu.core_type = #tpu.core_type<tc>} {
    %c0 = arith.constant 0 : index
    %c0_0 = arith.constant 0 : index
    %0 = vector.load %arg5[%c0, %c0_0] : memref<8x128xf32, #tpu.memory_space<vmem>>, vector<8x128xf32>
    %c0_1 = arith.constant 0 : index
    %c0_2 = arith.constant 0 : index
    %1 = vector.load %arg6[%c0_1, %c0_2] : memref<8x128xf32, #tpu.memory_space<vmem>>, vector<8x128xf32>
    %c0_3 = arith.constant 0 : index
    %c0_4 = arith.constant 0 : index
    %2 = vector.load %arg2[%c0_3, %c0_4] : memref<128x128xbf16, #tpu.memory_space<vmem>>, vector<128x128xbf16>
    %c0_5 = arith.constant 0 : index
    %c0_6 = arith.constant 0 : index
    %3 = vector.load %arg1[%c0_5, %c0_6] : memref<8x128xf32, #tpu.memory_space<vmem>>, vector<8x128xf32>
    %4 = arith.truncf %3 : vector<8x128xf32> to vector<8x128xbf16>
    %cst = arith.constant dense<0.000000e+00> : vector<8x128xf32>
    %5 = tpu.matmul %4, %2, %cst {dimension_numbers = #tpu.dot_dimension_numbers<[1], [0], [0], [1], [0, 0, 1, 1], [], []>} : vector<8x128xbf16>, vector<128x128xbf16>, vector<8x128xf32> -> vector<8x128xf32>
    %c0_7 = arith.constant 0 : index
    %c0_8 = arith.constant 0 : index
    %6 = vector.load %arg3[%c0_7, %c0_8] : memref<20x128xf32, #tpu.memory_space<vmem>>, vector<1x128xf32>
    %7 = vector.broadcast %6 : vector<1x128xf32> to vector<8x128xf32>
    %8 = arith.addf %5, %7 : vector<8x128xf32>
    %c0_9 = arith.constant 0 : index
    %9 = memref.load %arg0[%c0_9] : memref<60xf32, #tpu.memory_space<smem>>
    %c1 = arith.constant 1 : index
    %10 = memref.load %arg0[%c1] : memref<60xf32, #tpu.memory_space<smem>>
    %c2 = arith.constant 2 : index
    %11 = memref.load %arg0[%c2] : memref<60xf32, #tpu.memory_space<smem>>
    %cst_10 = arith.constant -1.000000e+00 : f32
    %cst_11 = arith.constant 1.000000e+00 : f32
    %12 = vector.broadcast %cst_10 : f32 to vector<8x128xf32>
    %13 = arith.maximumf %12, %8 : vector<8x128xf32>
    %14 = vector.broadcast %cst_11 : f32 to vector<8x128xf32>
    %15 = arith.minimumf %14, %13 : vector<8x128xf32>
    %16 = vector.broadcast %9 : f32 to vector<8x128xf32>
    %17 = arith.mulf %16, %15 : vector<8x128xf32>
    %18 = vector.broadcast %10 : f32 to vector<8x128xf32>
    %19 = arith.mulf %18, %3 : vector<8x128xf32>
    %20 = arith.addf %17, %19 : vector<8x128xf32>
    %c0_12 = arith.constant 0 : index
    %c0_13 = arith.constant 0 : index
    %c0_14 = arith.constant 0 : index
    %21 = vector.load %arg4[%c0_12, %c0_13, %c0_14] : memref<20x8x128xf32, #tpu.memory_space<vmem>>, vector<1x8x128xf32>
    %22 = vector.shape_cast %21 : vector<1x8x128xf32> to vector<8x128xf32>
    %23 = vector.broadcast %11 : f32 to vector<8x128xf32>
    %24 = arith.mulf %23, %22 : vector<8x128xf32>
    %25 = arith.addf %20, %24 : vector<8x128xf32>
    %cst_15 = arith.constant 5.000000e-01 : f32
    %26 = vector.broadcast %cst_15 : f32 to vector<8x128xf32>
    %27 = arith.cmpf ogt, %0, %26 : vector<8x128xf32>
    %28 = arith.select %27, %1, %25 : vector<8x128xi1>, vector<8x128xf32>
    %29 = arith.truncf %28 : vector<8x128xf32> to vector<8x128xbf16>
    %cst_16 = arith.constant dense<0.000000e+00> : vector<8x128xf32>
    %30 = tpu.matmul %29, %2, %cst_16 {dimension_numbers = #tpu.dot_dimension_numbers<[1], [0], [0], [1], [0, 0, 1, 1], [], []>} : vector<8x128xbf16>, vector<128x128xbf16>, vector<8x128xf32> -> vector<8x128xf32>
    %c1_17 = arith.constant 1 : index
    %c0_18 = arith.constant 0 : index
    %31 = vector.load %arg3[%c1_17, %c0_18] : memref<20x128xf32, #tpu.memory_space<vmem>>, vector<1x128xf32>
    %32 = vector.broadcast %31 : vector<1x128xf32> to vector<8x128xf32>
    %33 = arith.addf %30, %32 : vector<8x128xf32>
    %c3 = arith.constant 3 : index
    %34 = memref.load %arg0[%c3] : memref<60xf32, #tpu.memory_space<smem>>
    %c4 = arith.constant 4 : index
    %35 = memref.load %arg0[%c4] : memref<60xf32, #tpu.memory_space<smem>>
    %c5 = arith.constant 5 : index
    %36 = memref.load %arg0[%c5] : memref<60xf32, #tpu.memory_space<smem>>
    %cst_19 = arith.constant -1.000000e+00 : f32
    %cst_20 = arith.constant 1.000000e+00 : f32
    %37 = vector.broadcast %cst_19 : f32 to vector<8x128xf32>
    %38 = arith.maximumf %37, %33 : vector<8x128xf32>
    %39 = vector.broadcast %cst_20 : f32 to vector<8x128xf32>
    %40 = arith.minimumf %39, %38 : vector<8x128xf32>
    %41 = vector.broadcast %34 : f32 to vector<8x128xf32>
    %42 = arith.mulf %41, %40 : vector<8x128xf32>
    %43 = vector.broadcast %35 : f32 to vector<8x128xf32>
    %44 = arith.mulf %43, %28 : vector<8x128xf32>
    %45 = arith.addf %42, %44 : vector<8x128xf32>
    %c1_21 = arith.constant 1 : index
    %c0_22 = arith.constant 0 : index
    %c0_23 = arith.constant 0 : index
    %46 = vector.load %arg4[%c1_21, %c0_22, %c0_23] : memref<20x8x128xf32, #tpu.memory_space<vmem>>, vector<1x8x128xf32>
    %47 = vector.shape_cast %46 : vector<1x8x128xf32> to vector<8x128xf32>
    %48 = vector.broadcast %36 : f32 to vector<8x128xf32>
    %49 = arith.mulf %48, %47 : vector<8x128xf32>
    %50 = arith.addf %45, %49 : vector<8x128xf32>
    %cst_24 = arith.constant 5.000000e-01 : f32
    %51 = vector.broadcast %cst_24 : f32 to vector<8x128xf32>
    %52 = arith.cmpf ogt, %0, %51 : vector<8x128xf32>
    %53 = arith.select %52, %1, %50 : vector<8x128xi1>, vector<8x128xf32>
    %54 = arith.truncf %53 : vector<8x128xf32> to vector<8x128xbf16>
    %cst_25 = arith.constant dense<0.000000e+00> : vector<8x128xf32>
    %55 = tpu.matmul %54, %2, %cst_25 {dimension_numbers = #tpu.dot_dimension_numbers<[1], [0], [0], [1], [0, 0, 1, 1], [], []>} : vector<8x128xbf16>, vector<128x128xbf16>, vector<8x128xf32> -> vector<8x128xf32>
    %c2_26 = arith.constant 2 : index
    %c0_27 = arith.constant 0 : index
    %56 = vector.load %arg3[%c2_26, %c0_27] : memref<20x128xf32, #tpu.memory_space<vmem>>, vector<1x128xf32>
    %57 = vector.broadcast %56 : vector<1x128xf32> to vector<8x128xf32>
    %58 = arith.addf %55, %57 : vector<8x128xf32>
    %c6 = arith.constant 6 : index
    %59 = memref.load %arg0[%c6] : memref<60xf32, #tpu.memory_space<smem>>
    %c7 = arith.constant 7 : index
    %60 = memref.load %arg0[%c7] : memref<60xf32, #tpu.memory_space<smem>>
    %c8 = arith.constant 8 : index
    %61 = memref.load %arg0[%c8] : memref<60xf32, #tpu.memory_space<smem>>
    %cst_28 = arith.constant -1.000000e+00 : f32
    %cst_29 = arith.constant 1.000000e+00 : f32
    %62 = vector.broadcast %cst_28 : f32 to vector<8x128xf32>
    %63 = arith.maximumf %62, %58 : vector<8x128xf32>
    %64 = vector.broadcast %cst_29 : f32 to vector<8x128xf32>
    %65 = arith.minimumf %64, %63 : vector<8x128xf32>
    %66 = vector.broadcast %59 : f32 to vector<8x128xf32>
    %67 = arith.mulf %66, %65 : vector<8x128xf32>
    %68 = vector.broadcast %60 : f32 to vector<8x128xf32>
    %69 = arith.mulf %68, %53 : vector<8x128xf32>
    %70 = arith.addf %67, %69 : vector<8x128xf32>
    %c2_30 = arith.constant 2 : index
    %c0_31 = arith.constant 0 : index
    %c0_32 = arith.constant 0 : index
    %71 = vector.load %arg4[%c2_30, %c0_31, %c0_32] : memref<20x8x128xf32, #tpu.memory_space<vmem>>, vector<1x8x128xf32>
    %72 = vector.shape_cast %71 : vector<1x8x128xf32> to vector<8x128xf32>
    %73 = vector.broadcast %61 : f32 to vector<8x128xf32>
    %74 = arith.mulf %73, %72 : vector<8x128xf32>
    %75 = arith.addf %70, %74 : vector<8x128xf32>
    %cst_33 = arith.constant 5.000000e-01 : f32
    %76 = vector.broadcast %cst_33 : f32 to vector<8x128xf32>
    %77 = arith.cmpf ogt, %0, %76 : vector<8x128xf32>
    %78 = arith.select %77, %1, %75 : vector<8x128xi1>, vector<8x128xf32>
    %79 = arith.truncf %78 : vector<8x128xf32> to vector<8x128xbf16>
    %cst_34 = arith.constant dense<0.000000e+00> : vector<8x128xf32>
    %80 = tpu.matmul %79, %2, %cst_34 {dimension_numbers = #tpu.dot_dimension_numbers<[1], [0], [0], [1], [0, 0, 1, 1], [], []>} : vector<8x128xbf16>, vector<128x128xbf16>, vector<8x128xf32> -> vector<8x128xf32>
    %c3_35 = arith.constant 3 : index
    %c0_36 = arith.constant 0 : index
    %81 = vector.load %arg3[%c3_35, %c0_36] : memref<20x128xf32, #tpu.memory_space<vmem>>, vector<1x128xf32>
    %82 = vector.broadcast %81 : vector<1x128xf32> to vector<8x128xf32>
    %83 = arith.addf %80, %82 : vector<8x128xf32>
    %c9 = arith.constant 9 : index
    %84 = memref.load %arg0[%c9] : memref<60xf32, #tpu.memory_space<smem>>
    %c10 = arith.constant 10 : index
    %85 = memref.load %arg0[%c10] : memref<60xf32, #tpu.memory_space<smem>>
    %c11 = arith.constant 11 : index
    %86 = memref.load %arg0[%c11] : memref<60xf32, #tpu.memory_space<smem>>
    %cst_37 = arith.constant -1.000000e+00 : f32
    %cst_38 = arith.constant 1.000000e+00 : f32
    %87 = vector.broadcast %cst_37 : f32 to vector<8x128xf32>
    %88 = arith.maximumf %87, %83 : vector<8x128xf32>
    %89 = vector.broadcast %cst_38 : f32 to vector<8x128xf32>
    %90 = arith.minimumf %89, %88 : vector<8x128xf32>
    %91 = vector.broadcast %84 : f32 to vector<8x128xf32>
    %92 = arith.mulf %91, %90 : vector<8x128xf32>
    %93 = vector.broadcast %85 : f32 to vector<8x128xf32>
    %94 = arith.mulf %93, %78 : vector<8x128xf32>
    %95 = arith.addf %92, %94 : vector<8x128xf32>
    %c3_39 = arith.constant 3 : index
    %c0_40 = arith.constant 0 : index
    %c0_41 = arith.constant 0 : index
    %96 = vector.load %arg4[%c3_39, %c0_40, %c0_41] : memref<20x8x128xf32, #tpu.memory_space<vmem>>, vector<1x8x128xf32>
    %97 = vector.shape_cast %96 : vector<1x8x128xf32> to vector<8x128xf32>
    %98 = vector.broadcast %86 : f32 to vector<8x128xf32>
    %99 = arith.mulf %98, %97 : vector<8x128xf32>
    %100 = arith.addf %95, %99 : vector<8x128xf32>
    %cst_42 = arith.constant 5.000000e-01 : f32
    %101 = vector.broadcast %cst_42 : f32 to vector<8x128xf32>
    %102 = arith.cmpf ogt, %0, %101 : vector<8x128xf32>
    %103 = arith.select %102, %1, %100 : vector<8x128xi1>, vector<8x128xf32>
    %104 = arith.truncf %103 : vector<8x128xf32> to vector<8x128xbf16>
    %cst_43 = arith.constant dense<0.000000e+00> : vector<8x128xf32>
    %105 = tpu.matmul %104, %2, %cst_43 {dimension_numbers = #tpu.dot_dimension_numbers<[1], [0], [0], [1], [0, 0, 1, 1], [], []>} : vector<8x128xbf16>, vector<128x128xbf16>, vector<8x128xf32> -> vector<8x128xf32>
    %c4_44 = arith.constant 4 : index
    %c0_45 = arith.constant 0 : index
    %106 = vector.load %arg3[%c4_44, %c0_45] : memref<20x128xf32, #tpu.memory_space<vmem>>, vector<1x128xf32>
    %107 = vector.broadcast %106 : vector<1x128xf32> to vector<8x128xf32>
    %108 = arith.addf %105, %107 : vector<8x128xf32>
    %c12 = arith.constant 12 : index
    %109 = memref.load %arg0[%c12] : memref<60xf32, #tpu.memory_space<smem>>
    %c13 = arith.constant 13 : index
    %110 = memref.load %arg0[%c13] : memref<60xf32, #tpu.memory_space<smem>>
    %c14 = arith.constant 14 : index
    %111 = memref.load %arg0[%c14] : memref<60xf32, #tpu.memory_space<smem>>
    %cst_46 = arith.constant -1.000000e+00 : f32
    %cst_47 = arith.constant 1.000000e+00 : f32
    %112 = vector.broadcast %cst_46 : f32 to vector<8x128xf32>
    %113 = arith.maximumf %112, %108 : vector<8x128xf32>
    %114 = vector.broadcast %cst_47 : f32 to vector<8x128xf32>
    %115 = arith.minimumf %114, %113 : vector<8x128xf32>
    %116 = vector.broadcast %109 : f32 to vector<8x128xf32>
    %117 = arith.mulf %116, %115 : vector<8x128xf32>
    %118 = vector.broadcast %110 : f32 to vector<8x128xf32>
    %119 = arith.mulf %118, %103 : vector<8x128xf32>
    %120 = arith.addf %117, %119 : vector<8x128xf32>
    %c4_48 = arith.constant 4 : index
    %c0_49 = arith.constant 0 : index
    %c0_50 = arith.constant 0 : index
    %121 = vector.load %arg4[%c4_48, %c0_49, %c0_50] : memref<20x8x128xf32, #tpu.memory_space<vmem>>, vector<1x8x128xf32>
    %122 = vector.shape_cast %121 : vector<1x8x128xf32> to vector<8x128xf32>
    %123 = vector.broadcast %111 : f32 to vector<8x128xf32>
    %124 = arith.mulf %123, %122 : vector<8x128xf32>
    %125 = arith.addf %120, %124 : vector<8x128xf32>
    %cst_51 = arith.constant 5.000000e-01 : f32
    %126 = vector.broadcast %cst_51 : f32 to vector<8x128xf32>
    %127 = arith.cmpf ogt, %0, %126 : vector<8x128xf32>
    %128 = arith.select %127, %1, %125 : vector<8x128xi1>, vector<8x128xf32>
    %129 = arith.truncf %128 : vector<8x128xf32> to vector<8x128xbf16>
    %cst_52 = arith.constant dense<0.000000e+00> : vector<8x128xf32>
    %130 = tpu.matmul %129, %2, %cst_52 {dimension_numbers = #tpu.dot_dimension_numbers<[1], [0], [0], [1], [0, 0, 1, 1], [], []>} : vector<8x128xbf16>, vector<128x128xbf16>, vector<8x128xf32> -> vector<8x128xf32>
    %c5_53 = arith.constant 5 : index
    %c0_54 = arith.constant 0 : index
    %131 = vector.load %arg3[%c5_53, %c0_54] : memref<20x128xf32, #tpu.memory_space<vmem>>, vector<1x128xf32>
    %132 = vector.broadcast %131 : vector<1x128xf32> to vector<8x128xf32>
    %133 = arith.addf %130, %132 : vector<8x128xf32>
    %c15 = arith.constant 15 : index
    %134 = memref.load %arg0[%c15] : memref<60xf32, #tpu.memory_space<smem>>
    %c16 = arith.constant 16 : index
    %135 = memref.load %arg0[%c16] : memref<60xf32, #tpu.memory_space<smem>>
    %c17 = arith.constant 17 : index
    %136 = memref.load %arg0[%c17] : memref<60xf32, #tpu.memory_space<smem>>
    %cst_55 = arith.constant -1.000000e+00 : f32
    %cst_56 = arith.constant 1.000000e+00 : f32
    %137 = vector.broadcast %cst_55 : f32 to vector<8x128xf32>
    %138 = arith.maximumf %137, %133 : vector<8x128xf32>
    %139 = vector.broadcast %cst_56 : f32 to vector<8x128xf32>
    %140 = arith.minimumf %139, %138 : vector<8x128xf32>
    %141 = vector.broadcast %134 : f32 to vector<8x128xf32>
    %142 = arith.mulf %141, %140 : vector<8x128xf32>
    %143 = vector.broadcast %135 : f32 to vector<8x128xf32>
    %144 = arith.mulf %143, %128 : vector<8x128xf32>
    %145 = arith.addf %142, %144 : vector<8x128xf32>
    %c5_57 = arith.constant 5 : index
    %c0_58 = arith.constant 0 : index
    %c0_59 = arith.constant 0 : index
    %146 = vector.load %arg4[%c5_57, %c0_58, %c0_59] : memref<20x8x128xf32, #tpu.memory_space<vmem>>, vector<1x8x128xf32>
    %147 = vector.shape_cast %146 : vector<1x8x128xf32> to vector<8x128xf32>
    %148 = vector.broadcast %136 : f32 to vector<8x128xf32>
    %149 = arith.mulf %148, %147 : vector<8x128xf32>
    %150 = arith.addf %145, %149 : vector<8x128xf32>
    %cst_60 = arith.constant 5.000000e-01 : f32
    %151 = vector.broadcast %cst_60 : f32 to vector<8x128xf32>
    %152 = arith.cmpf ogt, %0, %151 : vector<8x128xf32>
    %153 = arith.select %152, %1, %150 : vector<8x128xi1>, vector<8x128xf32>
    %154 = arith.truncf %153 : vector<8x128xf32> to vector<8x128xbf16>
    %cst_61 = arith.constant dense<0.000000e+00> : vector<8x128xf32>
    %155 = tpu.matmul %154, %2, %cst_61 {dimension_numbers = #tpu.dot_dimension_numbers<[1], [0], [0], [1], [0, 0, 1, 1], [], []>} : vector<8x128xbf16>, vector<128x128xbf16>, vector<8x128xf32> -> vector<8x128xf32>
    %c6_62 = arith.constant 6 : index
    %c0_63 = arith.constant 0 : index
    %156 = vector.load %arg3[%c6_62, %c0_63] : memref<20x128xf32, #tpu.memory_space<vmem>>, vector<1x128xf32>
    %157 = vector.broadcast %156 : vector<1x128xf32> to vector<8x128xf32>
    %158 = arith.addf %155, %157 : vector<8x128xf32>
    %c18 = arith.constant 18 : index
    %159 = memref.load %arg0[%c18] : memref<60xf32, #tpu.memory_space<smem>>
    %c19 = arith.constant 19 : index
    %160 = memref.load %arg0[%c19] : memref<60xf32, #tpu.memory_space<smem>>
    %c20 = arith.constant 20 : index
    %161 = memref.load %arg0[%c20] : memref<60xf32, #tpu.memory_space<smem>>
    %cst_64 = arith.constant -1.000000e+00 : f32
    %cst_65 = arith.constant 1.000000e+00 : f32
    %162 = vector.broadcast %cst_64 : f32 to vector<8x128xf32>
    %163 = arith.maximumf %162, %158 : vector<8x128xf32>
    %164 = vector.broadcast %cst_65 : f32 to vector<8x128xf32>
    %165 = arith.minimumf %164, %163 : vector<8x128xf32>
    %166 = vector.broadcast %159 : f32 to vector<8x128xf32>
    %167 = arith.mulf %166, %165 : vector<8x128xf32>
    %168 = vector.broadcast %160 : f32 to vector<8x128xf32>
    %169 = arith.mulf %168, %153 : vector<8x128xf32>
    %170 = arith.addf %167, %169 : vector<8x128xf32>
    %c6_66 = arith.constant 6 : index
    %c0_67 = arith.constant 0 : index
    %c0_68 = arith.constant 0 : index
    %171 = vector.load %arg4[%c6_66, %c0_67, %c0_68] : memref<20x8x128xf32, #tpu.memory_space<vmem>>, vector<1x8x128xf32>
    %172 = vector.shape_cast %171 : vector<1x8x128xf32> to vector<8x128xf32>
    %173 = vector.broadcast %161 : f32 to vector<8x128xf32>
    %174 = arith.mulf %173, %172 : vector<8x128xf32>
    %175 = arith.addf %170, %174 : vector<8x128xf32>
    %cst_69 = arith.constant 5.000000e-01 : f32
    %176 = vector.broadcast %cst_69 : f32 to vector<8x128xf32>
    %177 = arith.cmpf ogt, %0, %176 : vector<8x128xf32>
    %178 = arith.select %177, %1, %175 : vector<8x128xi1>, vector<8x128xf32>
    %179 = arith.truncf %178 : vector<8x128xf32> to vector<8x128xbf16>
    %cst_70 = arith.constant dense<0.000000e+00> : vector<8x128xf32>
    %180 = tpu.matmul %179, %2, %cst_70 {dimension_numbers = #tpu.dot_dimension_numbers<[1], [0], [0], [1], [0, 0, 1, 1], [], []>} : vector<8x128xbf16>, vector<128x128xbf16>, vector<8x128xf32> -> vector<8x128xf32>
    %c7_71 = arith.constant 7 : index
    %c0_72 = arith.constant 0 : index
    %181 = vector.load %arg3[%c7_71, %c0_72] : memref<20x128xf32, #tpu.memory_space<vmem>>, vector<1x128xf32>
    %182 = vector.broadcast %181 : vector<1x128xf32> to vector<8x128xf32>
    %183 = arith.addf %180, %182 : vector<8x128xf32>
    %c21 = arith.constant 21 : index
    %184 = memref.load %arg0[%c21] : memref<60xf32, #tpu.memory_space<smem>>
    %c22 = arith.constant 22 : index
    %185 = memref.load %arg0[%c22] : memref<60xf32, #tpu.memory_space<smem>>
    %c23 = arith.constant 23 : index
    %186 = memref.load %arg0[%c23] : memref<60xf32, #tpu.memory_space<smem>>
    %cst_73 = arith.constant -1.000000e+00 : f32
    %cst_74 = arith.constant 1.000000e+00 : f32
    %187 = vector.broadcast %cst_73 : f32 to vector<8x128xf32>
    %188 = arith.maximumf %187, %183 : vector<8x128xf32>
    %189 = vector.broadcast %cst_74 : f32 to vector<8x128xf32>
    %190 = arith.minimumf %189, %188 : vector<8x128xf32>
    %191 = vector.broadcast %184 : f32 to vector<8x128xf32>
    %192 = arith.mulf %191, %190 : vector<8x128xf32>
    %193 = vector.broadcast %185 : f32 to vector<8x128xf32>
    %194 = arith.mulf %193, %178 : vector<8x128xf32>
    %195 = arith.addf %192, %194 : vector<8x128xf32>
    %c7_75 = arith.constant 7 : index
    %c0_76 = arith.constant 0 : index
    %c0_77 = arith.constant 0 : index
    %196 = vector.load %arg4[%c7_75, %c0_76, %c0_77] : memref<20x8x128xf32, #tpu.memory_space<vmem>>, vector<1x8x128xf32>
    %197 = vector.shape_cast %196 : vector<1x8x128xf32> to vector<8x128xf32>
    %198 = vector.broadcast %186 : f32 to vector<8x128xf32>
    %199 = arith.mulf %198, %197 : vector<8x128xf32>
    %200 = arith.addf %195, %199 : vector<8x128xf32>
    %cst_78 = arith.constant 5.000000e-01 : f32
    %201 = vector.broadcast %cst_78 : f32 to vector<8x128xf32>
    %202 = arith.cmpf ogt, %0, %201 : vector<8x128xf32>
    %203 = arith.select %202, %1, %200 : vector<8x128xi1>, vector<8x128xf32>
    %204 = arith.truncf %203 : vector<8x128xf32> to vector<8x128xbf16>
    %cst_79 = arith.constant dense<0.000000e+00> : vector<8x128xf32>
    %205 = tpu.matmul %204, %2, %cst_79 {dimension_numbers = #tpu.dot_dimension_numbers<[1], [0], [0], [1], [0, 0, 1, 1], [], []>} : vector<8x128xbf16>, vector<128x128xbf16>, vector<8x128xf32> -> vector<8x128xf32>
    %c8_80 = arith.constant 8 : index
    %c0_81 = arith.constant 0 : index
    %206 = vector.load %arg3[%c8_80, %c0_81] : memref<20x128xf32, #tpu.memory_space<vmem>>, vector<1x128xf32>
    %207 = vector.broadcast %206 : vector<1x128xf32> to vector<8x128xf32>
    %208 = arith.addf %205, %207 : vector<8x128xf32>
    %c24 = arith.constant 24 : index
    %209 = memref.load %arg0[%c24] : memref<60xf32, #tpu.memory_space<smem>>
    %c25 = arith.constant 25 : index
    %210 = memref.load %arg0[%c25] : memref<60xf32, #tpu.memory_space<smem>>
    %c26 = arith.constant 26 : index
    %211 = memref.load %arg0[%c26] : memref<60xf32, #tpu.memory_space<smem>>
    %cst_82 = arith.constant -1.000000e+00 : f32
    %cst_83 = arith.constant 1.000000e+00 : f32
    %212 = vector.broadcast %cst_82 : f32 to vector<8x128xf32>
    %213 = arith.maximumf %212, %208 : vector<8x128xf32>
    %214 = vector.broadcast %cst_83 : f32 to vector<8x128xf32>
    %215 = arith.minimumf %214, %213 : vector<8x128xf32>
    %216 = vector.broadcast %209 : f32 to vector<8x128xf32>
    %217 = arith.mulf %216, %215 : vector<8x128xf32>
    %218 = vector.broadcast %210 : f32 to vector<8x128xf32>
    %219 = arith.mulf %218, %203 : vector<8x128xf32>
    %220 = arith.addf %217, %219 : vector<8x128xf32>
    %c8_84 = arith.constant 8 : index
    %c0_85 = arith.constant 0 : index
    %c0_86 = arith.constant 0 : index
    %221 = vector.load %arg4[%c8_84, %c0_85, %c0_86] : memref<20x8x128xf32, #tpu.memory_space<vmem>>, vector<1x8x128xf32>
    %222 = vector.shape_cast %221 : vector<1x8x128xf32> to vector<8x128xf32>
    %223 = vector.broadcast %211 : f32 to vector<8x128xf32>
    %224 = arith.mulf %223, %222 : vector<8x128xf32>
    %225 = arith.addf %220, %224 : vector<8x128xf32>
    %cst_87 = arith.constant 5.000000e-01 : f32
    %226 = vector.broadcast %cst_87 : f32 to vector<8x128xf32>
    %227 = arith.cmpf ogt, %0, %226 : vector<8x128xf32>
    %228 = arith.select %227, %1, %225 : vector<8x128xi1>, vector<8x128xf32>
    %229 = arith.truncf %228 : vector<8x128xf32> to vector<8x128xbf16>
    %cst_88 = arith.constant dense<0.000000e+00> : vector<8x128xf32>
    %230 = tpu.matmul %229, %2, %cst_88 {dimension_numbers = #tpu.dot_dimension_numbers<[1], [0], [0], [1], [0, 0, 1, 1], [], []>} : vector<8x128xbf16>, vector<128x128xbf16>, vector<8x128xf32> -> vector<8x128xf32>
    %c9_89 = arith.constant 9 : index
    %c0_90 = arith.constant 0 : index
    %231 = vector.load %arg3[%c9_89, %c0_90] : memref<20x128xf32, #tpu.memory_space<vmem>>, vector<1x128xf32>
    %232 = vector.broadcast %231 : vector<1x128xf32> to vector<8x128xf32>
    %233 = arith.addf %230, %232 : vector<8x128xf32>
    %c27 = arith.constant 27 : index
    %234 = memref.load %arg0[%c27] : memref<60xf32, #tpu.memory_space<smem>>
    %c28 = arith.constant 28 : index
    %235 = memref.load %arg0[%c28] : memref<60xf32, #tpu.memory_space<smem>>
    %c29 = arith.constant 29 : index
    %236 = memref.load %arg0[%c29] : memref<60xf32, #tpu.memory_space<smem>>
    %cst_91 = arith.constant -1.000000e+00 : f32
    %cst_92 = arith.constant 1.000000e+00 : f32
    %237 = vector.broadcast %cst_91 : f32 to vector<8x128xf32>
    %238 = arith.maximumf %237, %233 : vector<8x128xf32>
    %239 = vector.broadcast %cst_92 : f32 to vector<8x128xf32>
    %240 = arith.minimumf %239, %238 : vector<8x128xf32>
    %241 = vector.broadcast %234 : f32 to vector<8x128xf32>
    %242 = arith.mulf %241, %240 : vector<8x128xf32>
    %243 = vector.broadcast %235 : f32 to vector<8x128xf32>
    %244 = arith.mulf %243, %228 : vector<8x128xf32>
    %245 = arith.addf %242, %244 : vector<8x128xf32>
    %c9_93 = arith.constant 9 : index
    %c0_94 = arith.constant 0 : index
    %c0_95 = arith.constant 0 : index
    %246 = vector.load %arg4[%c9_93, %c0_94, %c0_95] : memref<20x8x128xf32, #tpu.memory_space<vmem>>, vector<1x8x128xf32>
    %247 = vector.shape_cast %246 : vector<1x8x128xf32> to vector<8x128xf32>
    %248 = vector.broadcast %236 : f32 to vector<8x128xf32>
    %249 = arith.mulf %248, %247 : vector<8x128xf32>
    %250 = arith.addf %245, %249 : vector<8x128xf32>
    %cst_96 = arith.constant 5.000000e-01 : f32
    %251 = vector.broadcast %cst_96 : f32 to vector<8x128xf32>
    %252 = arith.cmpf ogt, %0, %251 : vector<8x128xf32>
    %253 = arith.select %252, %1, %250 : vector<8x128xi1>, vector<8x128xf32>
    %254 = arith.truncf %253 : vector<8x128xf32> to vector<8x128xbf16>
    %cst_97 = arith.constant dense<0.000000e+00> : vector<8x128xf32>
    %255 = tpu.matmul %254, %2, %cst_97 {dimension_numbers = #tpu.dot_dimension_numbers<[1], [0], [0], [1], [0, 0, 1, 1], [], []>} : vector<8x128xbf16>, vector<128x128xbf16>, vector<8x128xf32> -> vector<8x128xf32>
    %c10_98 = arith.constant 10 : index
    %c0_99 = arith.constant 0 : index
    %256 = vector.load %arg3[%c10_98, %c0_99] : memref<20x128xf32, #tpu.memory_space<vmem>>, vector<1x128xf32>
    %257 = vector.broadcast %256 : vector<1x128xf32> to vector<8x128xf32>
    %258 = arith.addf %255, %257 : vector<8x128xf32>
    %c30 = arith.constant 30 : index
    %259 = memref.load %arg0[%c30] : memref<60xf32, #tpu.memory_space<smem>>
    %c31 = arith.constant 31 : index
    %260 = memref.load %arg0[%c31] : memref<60xf32, #tpu.memory_space<smem>>
    %c32 = arith.constant 32 : index
    %261 = memref.load %arg0[%c32] : memref<60xf32, #tpu.memory_space<smem>>
    %cst_100 = arith.constant -1.000000e+00 : f32
    %cst_101 = arith.constant 1.000000e+00 : f32
    %262 = vector.broadcast %cst_100 : f32 to vector<8x128xf32>
    %263 = arith.maximumf %262, %258 : vector<8x128xf32>
    %264 = vector.broadcast %cst_101 : f32 to vector<8x128xf32>
    %265 = arith.minimumf %264, %263 : vector<8x128xf32>
    %266 = vector.broadcast %259 : f32 to vector<8x128xf32>
    %267 = arith.mulf %266, %265 : vector<8x128xf32>
    %268 = vector.broadcast %260 : f32 to vector<8x128xf32>
    %269 = arith.mulf %268, %253 : vector<8x128xf32>
    %270 = arith.addf %267, %269 : vector<8x128xf32>
    %c10_102 = arith.constant 10 : index
    %c0_103 = arith.constant 0 : index
    %c0_104 = arith.constant 0 : index
    %271 = vector.load %arg4[%c10_102, %c0_103, %c0_104] : memref<20x8x128xf32, #tpu.memory_space<vmem>>, vector<1x8x128xf32>
    %272 = vector.shape_cast %271 : vector<1x8x128xf32> to vector<8x128xf32>
    %273 = vector.broadcast %261 : f32 to vector<8x128xf32>
    %274 = arith.mulf %273, %272 : vector<8x128xf32>
    %275 = arith.addf %270, %274 : vector<8x128xf32>
    %cst_105 = arith.constant 5.000000e-01 : f32
    %276 = vector.broadcast %cst_105 : f32 to vector<8x128xf32>
    %277 = arith.cmpf ogt, %0, %276 : vector<8x128xf32>
    %278 = arith.select %277, %1, %275 : vector<8x128xi1>, vector<8x128xf32>
    %279 = arith.truncf %278 : vector<8x128xf32> to vector<8x128xbf16>
    %cst_106 = arith.constant dense<0.000000e+00> : vector<8x128xf32>
    %280 = tpu.matmul %279, %2, %cst_106 {dimension_numbers = #tpu.dot_dimension_numbers<[1], [0], [0], [1], [0, 0, 1, 1], [], []>} : vector<8x128xbf16>, vector<128x128xbf16>, vector<8x128xf32> -> vector<8x128xf32>
    %c11_107 = arith.constant 11 : index
    %c0_108 = arith.constant 0 : index
    %281 = vector.load %arg3[%c11_107, %c0_108] : memref<20x128xf32, #tpu.memory_space<vmem>>, vector<1x128xf32>
    %282 = vector.broadcast %281 : vector<1x128xf32> to vector<8x128xf32>
    %283 = arith.addf %280, %282 : vector<8x128xf32>
    %c33 = arith.constant 33 : index
    %284 = memref.load %arg0[%c33] : memref<60xf32, #tpu.memory_space<smem>>
    %c34 = arith.constant 34 : index
    %285 = memref.load %arg0[%c34] : memref<60xf32, #tpu.memory_space<smem>>
    %c35 = arith.constant 35 : index
    %286 = memref.load %arg0[%c35] : memref<60xf32, #tpu.memory_space<smem>>
    %cst_109 = arith.constant -1.000000e+00 : f32
    %cst_110 = arith.constant 1.000000e+00 : f32
    %287 = vector.broadcast %cst_109 : f32 to vector<8x128xf32>
    %288 = arith.maximumf %287, %283 : vector<8x128xf32>
    %289 = vector.broadcast %cst_110 : f32 to vector<8x128xf32>
    %290 = arith.minimumf %289, %288 : vector<8x128xf32>
    %291 = vector.broadcast %284 : f32 to vector<8x128xf32>
    %292 = arith.mulf %291, %290 : vector<8x128xf32>
    %293 = vector.broadcast %285 : f32 to vector<8x128xf32>
    %294 = arith.mulf %293, %278 : vector<8x128xf32>
    %295 = arith.addf %292, %294 : vector<8x128xf32>
    %c11_111 = arith.constant 11 : index
    %c0_112 = arith.constant 0 : index
    %c0_113 = arith.constant 0 : index
    %296 = vector.load %arg4[%c11_111, %c0_112, %c0_113] : memref<20x8x128xf32, #tpu.memory_space<vmem>>, vector<1x8x128xf32>
    %297 = vector.shape_cast %296 : vector<1x8x128xf32> to vector<8x128xf32>
    %298 = vector.broadcast %286 : f32 to vector<8x128xf32>
    %299 = arith.mulf %298, %297 : vector<8x128xf32>
    %300 = arith.addf %295, %299 : vector<8x128xf32>
    %cst_114 = arith.constant 5.000000e-01 : f32
    %301 = vector.broadcast %cst_114 : f32 to vector<8x128xf32>
    %302 = arith.cmpf ogt, %0, %301 : vector<8x128xf32>
    %303 = arith.select %302, %1, %300 : vector<8x128xi1>, vector<8x128xf32>
    %304 = arith.truncf %303 : vector<8x128xf32> to vector<8x128xbf16>
    %cst_115 = arith.constant dense<0.000000e+00> : vector<8x128xf32>
    %305 = tpu.matmul %304, %2, %cst_115 {dimension_numbers = #tpu.dot_dimension_numbers<[1], [0], [0], [1], [0, 0, 1, 1], [], []>} : vector<8x128xbf16>, vector<128x128xbf16>, vector<8x128xf32> -> vector<8x128xf32>
    %c12_116 = arith.constant 12 : index
    %c0_117 = arith.constant 0 : index
    %306 = vector.load %arg3[%c12_116, %c0_117] : memref<20x128xf32, #tpu.memory_space<vmem>>, vector<1x128xf32>
    %307 = vector.broadcast %306 : vector<1x128xf32> to vector<8x128xf32>
    %308 = arith.addf %305, %307 : vector<8x128xf32>
    %c36 = arith.constant 36 : index
    %309 = memref.load %arg0[%c36] : memref<60xf32, #tpu.memory_space<smem>>
    %c37 = arith.constant 37 : index
    %310 = memref.load %arg0[%c37] : memref<60xf32, #tpu.memory_space<smem>>
    %c38 = arith.constant 38 : index
    %311 = memref.load %arg0[%c38] : memref<60xf32, #tpu.memory_space<smem>>
    %cst_118 = arith.constant -1.000000e+00 : f32
    %cst_119 = arith.constant 1.000000e+00 : f32
    %312 = vector.broadcast %cst_118 : f32 to vector<8x128xf32>
    %313 = arith.maximumf %312, %308 : vector<8x128xf32>
    %314 = vector.broadcast %cst_119 : f32 to vector<8x128xf32>
    %315 = arith.minimumf %314, %313 : vector<8x128xf32>
    %316 = vector.broadcast %309 : f32 to vector<8x128xf32>
    %317 = arith.mulf %316, %315 : vector<8x128xf32>
    %318 = vector.broadcast %310 : f32 to vector<8x128xf32>
    %319 = arith.mulf %318, %303 : vector<8x128xf32>
    %320 = arith.addf %317, %319 : vector<8x128xf32>
    %c12_120 = arith.constant 12 : index
    %c0_121 = arith.constant 0 : index
    %c0_122 = arith.constant 0 : index
    %321 = vector.load %arg4[%c12_120, %c0_121, %c0_122] : memref<20x8x128xf32, #tpu.memory_space<vmem>>, vector<1x8x128xf32>
    %322 = vector.shape_cast %321 : vector<1x8x128xf32> to vector<8x128xf32>
    %323 = vector.broadcast %311 : f32 to vector<8x128xf32>
    %324 = arith.mulf %323, %322 : vector<8x128xf32>
    %325 = arith.addf %320, %324 : vector<8x128xf32>
    %cst_123 = arith.constant 5.000000e-01 : f32
    %326 = vector.broadcast %cst_123 : f32 to vector<8x128xf32>
    %327 = arith.cmpf ogt, %0, %326 : vector<8x128xf32>
    %328 = arith.select %327, %1, %325 : vector<8x128xi1>, vector<8x128xf32>
    %329 = arith.truncf %328 : vector<8x128xf32> to vector<8x128xbf16>
    %cst_124 = arith.constant dense<0.000000e+00> : vector<8x128xf32>
    %330 = tpu.matmul %329, %2, %cst_124 {dimension_numbers = #tpu.dot_dimension_numbers<[1], [0], [0], [1], [0, 0, 1, 1], [], []>} : vector<8x128xbf16>, vector<128x128xbf16>, vector<8x128xf32> -> vector<8x128xf32>
    %c13_125 = arith.constant 13 : index
    %c0_126 = arith.constant 0 : index
    %331 = vector.load %arg3[%c13_125, %c0_126] : memref<20x128xf32, #tpu.memory_space<vmem>>, vector<1x128xf32>
    %332 = vector.broadcast %331 : vector<1x128xf32> to vector<8x128xf32>
    %333 = arith.addf %330, %332 : vector<8x128xf32>
    %c39 = arith.constant 39 : index
    %334 = memref.load %arg0[%c39] : memref<60xf32, #tpu.memory_space<smem>>
    %c40 = arith.constant 40 : index
    %335 = memref.load %arg0[%c40] : memref<60xf32, #tpu.memory_space<smem>>
    %c41 = arith.constant 41 : index
    %336 = memref.load %arg0[%c41] : memref<60xf32, #tpu.memory_space<smem>>
    %cst_127 = arith.constant -1.000000e+00 : f32
    %cst_128 = arith.constant 1.000000e+00 : f32
    %337 = vector.broadcast %cst_127 : f32 to vector<8x128xf32>
    %338 = arith.maximumf %337, %333 : vector<8x128xf32>
    %339 = vector.broadcast %cst_128 : f32 to vector<8x128xf32>
    %340 = arith.minimumf %339, %338 : vector<8x128xf32>
    %341 = vector.broadcast %334 : f32 to vector<8x128xf32>
    %342 = arith.mulf %341, %340 : vector<8x128xf32>
    %343 = vector.broadcast %335 : f32 to vector<8x128xf32>
    %344 = arith.mulf %343, %328 : vector<8x128xf32>
    %345 = arith.addf %342, %344 : vector<8x128xf32>
    %c13_129 = arith.constant 13 : index
    %c0_130 = arith.constant 0 : index
    %c0_131 = arith.constant 0 : index
    %346 = vector.load %arg4[%c13_129, %c0_130, %c0_131] : memref<20x8x128xf32, #tpu.memory_space<vmem>>, vector<1x8x128xf32>
    %347 = vector.shape_cast %346 : vector<1x8x128xf32> to vector<8x128xf32>
    %348 = vector.broadcast %336 : f32 to vector<8x128xf32>
    %349 = arith.mulf %348, %347 : vector<8x128xf32>
    %350 = arith.addf %345, %349 : vector<8x128xf32>
    %cst_132 = arith.constant 5.000000e-01 : f32
    %351 = vector.broadcast %cst_132 : f32 to vector<8x128xf32>
    %352 = arith.cmpf ogt, %0, %351 : vector<8x128xf32>
    %353 = arith.select %352, %1, %350 : vector<8x128xi1>, vector<8x128xf32>
    %354 = arith.truncf %353 : vector<8x128xf32> to vector<8x128xbf16>
    %cst_133 = arith.constant dense<0.000000e+00> : vector<8x128xf32>
    %355 = tpu.matmul %354, %2, %cst_133 {dimension_numbers = #tpu.dot_dimension_numbers<[1], [0], [0], [1], [0, 0, 1, 1], [], []>} : vector<8x128xbf16>, vector<128x128xbf16>, vector<8x128xf32> -> vector<8x128xf32>
    %c14_134 = arith.constant 14 : index
    %c0_135 = arith.constant 0 : index
    %356 = vector.load %arg3[%c14_134, %c0_135] : memref<20x128xf32, #tpu.memory_space<vmem>>, vector<1x128xf32>
    %357 = vector.broadcast %356 : vector<1x128xf32> to vector<8x128xf32>
    %358 = arith.addf %355, %357 : vector<8x128xf32>
    %c42 = arith.constant 42 : index
    %359 = memref.load %arg0[%c42] : memref<60xf32, #tpu.memory_space<smem>>
    %c43 = arith.constant 43 : index
    %360 = memref.load %arg0[%c43] : memref<60xf32, #tpu.memory_space<smem>>
    %c44 = arith.constant 44 : index
    %361 = memref.load %arg0[%c44] : memref<60xf32, #tpu.memory_space<smem>>
    %cst_136 = arith.constant -1.000000e+00 : f32
    %cst_137 = arith.constant 1.000000e+00 : f32
    %362 = vector.broadcast %cst_136 : f32 to vector<8x128xf32>
    %363 = arith.maximumf %362, %358 : vector<8x128xf32>
    %364 = vector.broadcast %cst_137 : f32 to vector<8x128xf32>
    %365 = arith.minimumf %364, %363 : vector<8x128xf32>
    %366 = vector.broadcast %359 : f32 to vector<8x128xf32>
    %367 = arith.mulf %366, %365 : vector<8x128xf32>
    %368 = vector.broadcast %360 : f32 to vector<8x128xf32>
    %369 = arith.mulf %368, %353 : vector<8x128xf32>
    %370 = arith.addf %367, %369 : vector<8x128xf32>
    %c14_138 = arith.constant 14 : index
    %c0_139 = arith.constant 0 : index
    %c0_140 = arith.constant 0 : index
    %371 = vector.load %arg4[%c14_138, %c0_139, %c0_140] : memref<20x8x128xf32, #tpu.memory_space<vmem>>, vector<1x8x128xf32>
    %372 = vector.shape_cast %371 : vector<1x8x128xf32> to vector<8x128xf32>
    %373 = vector.broadcast %361 : f32 to vector<8x128xf32>
    %374 = arith.mulf %373, %372 : vector<8x128xf32>
    %375 = arith.addf %370, %374 : vector<8x128xf32>
    %cst_141 = arith.constant 5.000000e-01 : f32
    %376 = vector.broadcast %cst_141 : f32 to vector<8x128xf32>
    %377 = arith.cmpf ogt, %0, %376 : vector<8x128xf32>
    %378 = arith.select %377, %1, %375 : vector<8x128xi1>, vector<8x128xf32>
    %379 = arith.truncf %378 : vector<8x128xf32> to vector<8x128xbf16>
    %cst_142 = arith.constant dense<0.000000e+00> : vector<8x128xf32>
    %380 = tpu.matmul %379, %2, %cst_142 {dimension_numbers = #tpu.dot_dimension_numbers<[1], [0], [0], [1], [0, 0, 1, 1], [], []>} : vector<8x128xbf16>, vector<128x128xbf16>, vector<8x128xf32> -> vector<8x128xf32>
    %c15_143 = arith.constant 15 : index
    %c0_144 = arith.constant 0 : index
    %381 = vector.load %arg3[%c15_143, %c0_144] : memref<20x128xf32, #tpu.memory_space<vmem>>, vector<1x128xf32>
    %382 = vector.broadcast %381 : vector<1x128xf32> to vector<8x128xf32>
    %383 = arith.addf %380, %382 : vector<8x128xf32>
    %c45 = arith.constant 45 : index
    %384 = memref.load %arg0[%c45] : memref<60xf32, #tpu.memory_space<smem>>
    %c46 = arith.constant 46 : index
    %385 = memref.load %arg0[%c46] : memref<60xf32, #tpu.memory_space<smem>>
    %c47 = arith.constant 47 : index
    %386 = memref.load %arg0[%c47] : memref<60xf32, #tpu.memory_space<smem>>
    %cst_145 = arith.constant -1.000000e+00 : f32
    %cst_146 = arith.constant 1.000000e+00 : f32
    %387 = vector.broadcast %cst_145 : f32 to vector<8x128xf32>
    %388 = arith.maximumf %387, %383 : vector<8x128xf32>
    %389 = vector.broadcast %cst_146 : f32 to vector<8x128xf32>
    %390 = arith.minimumf %389, %388 : vector<8x128xf32>
    %391 = vector.broadcast %384 : f32 to vector<8x128xf32>
    %392 = arith.mulf %391, %390 : vector<8x128xf32>
    %393 = vector.broadcast %385 : f32 to vector<8x128xf32>
    %394 = arith.mulf %393, %378 : vector<8x128xf32>
    %395 = arith.addf %392, %394 : vector<8x128xf32>
    %c15_147 = arith.constant 15 : index
    %c0_148 = arith.constant 0 : index
    %c0_149 = arith.constant 0 : index
    %396 = vector.load %arg4[%c15_147, %c0_148, %c0_149] : memref<20x8x128xf32, #tpu.memory_space<vmem>>, vector<1x8x128xf32>
    %397 = vector.shape_cast %396 : vector<1x8x128xf32> to vector<8x128xf32>
    %398 = vector.broadcast %386 : f32 to vector<8x128xf32>
    %399 = arith.mulf %398, %397 : vector<8x128xf32>
    %400 = arith.addf %395, %399 : vector<8x128xf32>
    %cst_150 = arith.constant 5.000000e-01 : f32
    %401 = vector.broadcast %cst_150 : f32 to vector<8x128xf32>
    %402 = arith.cmpf ogt, %0, %401 : vector<8x128xf32>
    %403 = arith.select %402, %1, %400 : vector<8x128xi1>, vector<8x128xf32>
    %404 = arith.truncf %403 : vector<8x128xf32> to vector<8x128xbf16>
    %cst_151 = arith.constant dense<0.000000e+00> : vector<8x128xf32>
    %405 = tpu.matmul %404, %2, %cst_151 {dimension_numbers = #tpu.dot_dimension_numbers<[1], [0], [0], [1], [0, 0, 1, 1], [], []>} : vector<8x128xbf16>, vector<128x128xbf16>, vector<8x128xf32> -> vector<8x128xf32>
    %c16_152 = arith.constant 16 : index
    %c0_153 = arith.constant 0 : index
    %406 = vector.load %arg3[%c16_152, %c0_153] : memref<20x128xf32, #tpu.memory_space<vmem>>, vector<1x128xf32>
    %407 = vector.broadcast %406 : vector<1x128xf32> to vector<8x128xf32>
    %408 = arith.addf %405, %407 : vector<8x128xf32>
    %c48 = arith.constant 48 : index
    %409 = memref.load %arg0[%c48] : memref<60xf32, #tpu.memory_space<smem>>
    %c49 = arith.constant 49 : index
    %410 = memref.load %arg0[%c49] : memref<60xf32, #tpu.memory_space<smem>>
    %c50 = arith.constant 50 : index
    %411 = memref.load %arg0[%c50] : memref<60xf32, #tpu.memory_space<smem>>
    %cst_154 = arith.constant -1.000000e+00 : f32
    %cst_155 = arith.constant 1.000000e+00 : f32
    %412 = vector.broadcast %cst_154 : f32 to vector<8x128xf32>
    %413 = arith.maximumf %412, %408 : vector<8x128xf32>
    %414 = vector.broadcast %cst_155 : f32 to vector<8x128xf32>
    %415 = arith.minimumf %414, %413 : vector<8x128xf32>
    %416 = vector.broadcast %409 : f32 to vector<8x128xf32>
    %417 = arith.mulf %416, %415 : vector<8x128xf32>
    %418 = vector.broadcast %410 : f32 to vector<8x128xf32>
    %419 = arith.mulf %418, %403 : vector<8x128xf32>
    %420 = arith.addf %417, %419 : vector<8x128xf32>
    %c16_156 = arith.constant 16 : index
    %c0_157 = arith.constant 0 : index
    %c0_158 = arith.constant 0 : index
    %421 = vector.load %arg4[%c16_156, %c0_157, %c0_158] : memref<20x8x128xf32, #tpu.memory_space<vmem>>, vector<1x8x128xf32>
    %422 = vector.shape_cast %421 : vector<1x8x128xf32> to vector<8x128xf32>
    %423 = vector.broadcast %411 : f32 to vector<8x128xf32>
    %424 = arith.mulf %423, %422 : vector<8x128xf32>
    %425 = arith.addf %420, %424 : vector<8x128xf32>
    %cst_159 = arith.constant 5.000000e-01 : f32
    %426 = vector.broadcast %cst_159 : f32 to vector<8x128xf32>
    %427 = arith.cmpf ogt, %0, %426 : vector<8x128xf32>
    %428 = arith.select %427, %1, %425 : vector<8x128xi1>, vector<8x128xf32>
    %429 = arith.truncf %428 : vector<8x128xf32> to vector<8x128xbf16>
    %cst_160 = arith.constant dense<0.000000e+00> : vector<8x128xf32>
    %430 = tpu.matmul %429, %2, %cst_160 {dimension_numbers = #tpu.dot_dimension_numbers<[1], [0], [0], [1], [0, 0, 1, 1], [], []>} : vector<8x128xbf16>, vector<128x128xbf16>, vector<8x128xf32> -> vector<8x128xf32>
    %c17_161 = arith.constant 17 : index
    %c0_162 = arith.constant 0 : index
    %431 = vector.load %arg3[%c17_161, %c0_162] : memref<20x128xf32, #tpu.memory_space<vmem>>, vector<1x128xf32>
    %432 = vector.broadcast %431 : vector<1x128xf32> to vector<8x128xf32>
    %433 = arith.addf %430, %432 : vector<8x128xf32>
    %c51 = arith.constant 51 : index
    %434 = memref.load %arg0[%c51] : memref<60xf32, #tpu.memory_space<smem>>
    %c52 = arith.constant 52 : index
    %435 = memref.load %arg0[%c52] : memref<60xf32, #tpu.memory_space<smem>>
    %c53 = arith.constant 53 : index
    %436 = memref.load %arg0[%c53] : memref<60xf32, #tpu.memory_space<smem>>
    %cst_163 = arith.constant -1.000000e+00 : f32
    %cst_164 = arith.constant 1.000000e+00 : f32
    %437 = vector.broadcast %cst_163 : f32 to vector<8x128xf32>
    %438 = arith.maximumf %437, %433 : vector<8x128xf32>
    %439 = vector.broadcast %cst_164 : f32 to vector<8x128xf32>
    %440 = arith.minimumf %439, %438 : vector<8x128xf32>
    %441 = vector.broadcast %434 : f32 to vector<8x128xf32>
    %442 = arith.mulf %441, %440 : vector<8x128xf32>
    %443 = vector.broadcast %435 : f32 to vector<8x128xf32>
    %444 = arith.mulf %443, %428 : vector<8x128xf32>
    %445 = arith.addf %442, %444 : vector<8x128xf32>
    %c17_165 = arith.constant 17 : index
    %c0_166 = arith.constant 0 : index
    %c0_167 = arith.constant 0 : index
    %446 = vector.load %arg4[%c17_165, %c0_166, %c0_167] : memref<20x8x128xf32, #tpu.memory_space<vmem>>, vector<1x8x128xf32>
    %447 = vector.shape_cast %446 : vector<1x8x128xf32> to vector<8x128xf32>
    %448 = vector.broadcast %436 : f32 to vector<8x128xf32>
    %449 = arith.mulf %448, %447 : vector<8x128xf32>
    %450 = arith.addf %445, %449 : vector<8x128xf32>
    %cst_168 = arith.constant 5.000000e-01 : f32
    %451 = vector.broadcast %cst_168 : f32 to vector<8x128xf32>
    %452 = arith.cmpf ogt, %0, %451 : vector<8x128xf32>
    %453 = arith.select %452, %1, %450 : vector<8x128xi1>, vector<8x128xf32>
    %454 = arith.truncf %453 : vector<8x128xf32> to vector<8x128xbf16>
    %cst_169 = arith.constant dense<0.000000e+00> : vector<8x128xf32>
    %455 = tpu.matmul %454, %2, %cst_169 {dimension_numbers = #tpu.dot_dimension_numbers<[1], [0], [0], [1], [0, 0, 1, 1], [], []>} : vector<8x128xbf16>, vector<128x128xbf16>, vector<8x128xf32> -> vector<8x128xf32>
    %c18_170 = arith.constant 18 : index
    %c0_171 = arith.constant 0 : index
    %456 = vector.load %arg3[%c18_170, %c0_171] : memref<20x128xf32, #tpu.memory_space<vmem>>, vector<1x128xf32>
    %457 = vector.broadcast %456 : vector<1x128xf32> to vector<8x128xf32>
    %458 = arith.addf %455, %457 : vector<8x128xf32>
    %c54 = arith.constant 54 : index
    %459 = memref.load %arg0[%c54] : memref<60xf32, #tpu.memory_space<smem>>
    %c55 = arith.constant 55 : index
    %460 = memref.load %arg0[%c55] : memref<60xf32, #tpu.memory_space<smem>>
    %c56 = arith.constant 56 : index
    %461 = memref.load %arg0[%c56] : memref<60xf32, #tpu.memory_space<smem>>
    %cst_172 = arith.constant -1.000000e+00 : f32
    %cst_173 = arith.constant 1.000000e+00 : f32
    %462 = vector.broadcast %cst_172 : f32 to vector<8x128xf32>
    %463 = arith.maximumf %462, %458 : vector<8x128xf32>
    %464 = vector.broadcast %cst_173 : f32 to vector<8x128xf32>
    %465 = arith.minimumf %464, %463 : vector<8x128xf32>
    %466 = vector.broadcast %459 : f32 to vector<8x128xf32>
    %467 = arith.mulf %466, %465 : vector<8x128xf32>
    %468 = vector.broadcast %460 : f32 to vector<8x128xf32>
    %469 = arith.mulf %468, %453 : vector<8x128xf32>
    %470 = arith.addf %467, %469 : vector<8x128xf32>
    %c18_174 = arith.constant 18 : index
    %c0_175 = arith.constant 0 : index
    %c0_176 = arith.constant 0 : index
    %471 = vector.load %arg4[%c18_174, %c0_175, %c0_176] : memref<20x8x128xf32, #tpu.memory_space<vmem>>, vector<1x8x128xf32>
    %472 = vector.shape_cast %471 : vector<1x8x128xf32> to vector<8x128xf32>
    %473 = vector.broadcast %461 : f32 to vector<8x128xf32>
    %474 = arith.mulf %473, %472 : vector<8x128xf32>
    %475 = arith.addf %470, %474 : vector<8x128xf32>
    %cst_177 = arith.constant 5.000000e-01 : f32
    %476 = vector.broadcast %cst_177 : f32 to vector<8x128xf32>
    %477 = arith.cmpf ogt, %0, %476 : vector<8x128xf32>
    %478 = arith.select %477, %1, %475 : vector<8x128xi1>, vector<8x128xf32>
    %479 = arith.truncf %478 : vector<8x128xf32> to vector<8x128xbf16>
    %cst_178 = arith.constant dense<0.000000e+00> : vector<8x128xf32>
    %480 = tpu.matmul %479, %2, %cst_178 {dimension_numbers = #tpu.dot_dimension_numbers<[1], [0], [0], [1], [0, 0, 1, 1], [], []>} : vector<8x128xbf16>, vector<128x128xbf16>, vector<8x128xf32> -> vector<8x128xf32>
    %c19_179 = arith.constant 19 : index
    %c0_180 = arith.constant 0 : index
    %481 = vector.load %arg3[%c19_179, %c0_180] : memref<20x128xf32, #tpu.memory_space<vmem>>, vector<1x128xf32>
    %482 = vector.broadcast %481 : vector<1x128xf32> to vector<8x128xf32>
    %483 = arith.addf %480, %482 : vector<8x128xf32>
    %c57 = arith.constant 57 : index
    %484 = memref.load %arg0[%c57] : memref<60xf32, #tpu.memory_space<smem>>
    %c58 = arith.constant 58 : index
    %485 = memref.load %arg0[%c58] : memref<60xf32, #tpu.memory_space<smem>>
    %c59 = arith.constant 59 : index
    %486 = memref.load %arg0[%c59] : memref<60xf32, #tpu.memory_space<smem>>
    %cst_181 = arith.constant -1.000000e+00 : f32
    %cst_182 = arith.constant 1.000000e+00 : f32
    %487 = vector.broadcast %cst_181 : f32 to vector<8x128xf32>
    %488 = arith.maximumf %487, %483 : vector<8x128xf32>
    %489 = vector.broadcast %cst_182 : f32 to vector<8x128xf32>
    %490 = arith.minimumf %489, %488 : vector<8x128xf32>
    %491 = vector.broadcast %484 : f32 to vector<8x128xf32>
    %492 = arith.mulf %491, %490 : vector<8x128xf32>
    %493 = vector.broadcast %485 : f32 to vector<8x128xf32>
    %494 = arith.mulf %493, %478 : vector<8x128xf32>
    %495 = arith.addf %492, %494 : vector<8x128xf32>
    %c19_183 = arith.constant 19 : index
    %c0_184 = arith.constant 0 : index
    %c0_185 = arith.constant 0 : index
    %496 = vector.load %arg4[%c19_183, %c0_184, %c0_185] : memref<20x8x128xf32, #tpu.memory_space<vmem>>, vector<1x8x128xf32>
    %497 = vector.shape_cast %496 : vector<1x8x128xf32> to vector<8x128xf32>
    %498 = vector.broadcast %486 : f32 to vector<8x128xf32>
    %499 = arith.mulf %498, %497 : vector<8x128xf32>
    %500 = arith.addf %495, %499 : vector<8x128xf32>
    %cst_186 = arith.constant 5.000000e-01 : f32
    %501 = vector.broadcast %cst_186 : f32 to vector<8x128xf32>
    %502 = arith.cmpf ogt, %0, %501 : vector<8x128xf32>
    %503 = arith.select %502, %1, %500 : vector<8x128xi1>, vector<8x128xf32>
    %c0_187 = arith.constant 0 : index
    %c0_188 = arith.constant 0 : index
    %504 = vector.load %arg7[%c0_187, %c0_188] : memref<8x128xf32, #tpu.memory_space<vmem>>, vector<8x128xf32>
    tpu.vector_store %arg7[%c0_187, %c0_188], %503 {strides = array<i32>} : memref<8x128xf32, #tpu.memory_space<vmem>>, vector<8x128xf32>,
    return
  }
}

</mosaic_0001>

<llo_original>
// kernel: ddpm_reverse_pallas.1
$region0: #{ddpm_reverse_pallas.1}
  #allocation0 [shape = 'u32[]', space=smem, size = 0x4, offset = 0x4, fixed_abs, tag = 'smem constant byte address 0x4 - core index']
  #allocation1 [shape = 'u32[144,128]{1,0:T(1,128)}', space=vmem, size = 0x12000, scoped, tag = 'internal scratch']
  %s0 = inlined_call_operand.hbm [shape: f32[60], index: 0, kind: input, shape index: {}]
  %s1 = inlined_call_operand.hbm [shape: f32[8,128], index: 1, kind: input, shape index: {}]
  %s2 = inlined_call_operand.hbm [shape: bf16[128,128], index: 2, kind: input, shape index: {}]
  %s3 = inlined_call_operand.hbm [shape: f32[20,128], index: 3, kind: input, shape index: {}]
  %s4 = inlined_call_operand.hbm [shape: f32[20,8,128], index: 4, kind: input, shape index: {}]
  %s5 = inlined_call_operand.vmem [shape: f32[8,128], index: 5, kind: input, shape index: {}]
  %s6 = inlined_call_operand.vmem [shape: f32[8,128], index: 6, kind: input, shape index: {}]
  %s7 = inlined_call_operand.hbm [shape: f32[8,128], index: 7, kind: output, shape index: {}]
  %s8 = sld [smem:[#allocation0]]
  $region58: #{ddpm_reverse_pallas.1} parent=0
    _
  %s10 = ssub.s32 1, %s8
  %s11 = scalar_select 0, %s10, %s8
  $region1: #{ddpm_reverse_pallas.1} parent=0
    #allocation2 [shape = 'u8[512]{0}', space=smem, size = 0x200, scoped, tag = 'input window, operand 0, single buffered']
    #allocation3 [shape = 's32[1]{0}', space=sflag, size = 0x4, scoped, tag = 'scoped memory for ddpm_reverse_pallas.1']
    #allocation4 [shape = 's32[1]{0}', space=sflag, size = 0x4, scoped, tag = 'scoped memory for ddpm_reverse_pallas.1']
    #allocation5 [shape = 's32[1]{0}', space=sflag, size = 0x4, scoped, tag = 'scoped memory for ddpm_reverse_pallas.1']
    #allocation6 [shape = 'u8[4096]{0}', space=vmem, size = 0x1000, scoped, tag = 'input window, operand 1, single buffered']
    #allocation7 [shape = 'u8[32768]{0}', space=vmem, size = 0x8000, scoped, tag = 'input window, operand 2, single buffered']
    #allocation8 [shape = 's32[1]{0}', space=sflag, size = 0x4, scoped, tag = 'scoped memory for ddpm_reverse_pallas.1']
    #allocation9 [shape = 'u8[12288]{0}', space=vmem, size = 0x3000, scoped, tag = 'input window, operand 3, single buffered']
    #allocation10 [shape = 'u8[81920]{0}', space=vmem, size = 0x14000, scoped, tag = 'input window, operand 4, single buffered']
    #allocation11 [shape = 's32[1]{0}', space=sflag, size = 0x4, scoped, tag = 'scoped memory for ddpm_reverse_pallas.1']
    #allocation12 [shape = 'u8[4096]{0}', space=vmem, size = 0x1000, scoped, tag = 'output window, operand 0, single buffered']
    %12 = vsyncpa [#allocation5], 0
    %13 = vsyncpa [#allocation3], 0
    %14 = vsyncpa [#allocation8], 0
    %15 = vsyncpa [#allocation11], 0
    %16 = vsyncpa [#allocation4], 0
    // Predicated region
    $region2: #{ddpm_reverse_pallas.1} parent=1 // pred_check
      _
    $region3: #{ddpm_reverse_pallas.1} parent=1 // pred_check_branch
      %18 = sbr.rel (0) target = $region5
    $region4: #{ddpm_reverse_pallas.1} parent=1 // pred_region
      %s20 = ssub.s32 16, 16
      %21 = vsyncadd [#allocation5], %s20
      %24 = dma.hbm_to_smem %s0, 16, [#allocation2], [#allocation5]
    $region5: #{ddpm_reverse_pallas.1} parent=1 // pred_fallthru
      _
    // Predicated region
    $region6: #{ddpm_reverse_pallas.1} parent=1 // pred_check
      _
    $region7: #{ddpm_reverse_pallas.1} parent=1 // pred_check_branch
      %26 = sbr.rel (0) target = $region9
    $region8: #{ddpm_reverse_pallas.1} parent=1 // pred_region
      %s28 = ssub.s32 128, 128
      %29 = vsyncadd [#allocation3], %s28
      %s31 = sshll.u32 [#allocation6], 4
      %s32 = int_to_ptr.vmem [resolvable:$true] %s31
      %34 = dma.hbm_to_vmem [thread:$0]  %s1, 128, %s32, [#allocation3]
    $region9: #{ddpm_reverse_pallas.1} parent=1 // pred_fallthru
      _
    // Predicated region
    $region10: #{ddpm_reverse_pallas.1} parent=1 // pred_check
      _
    $region11: #{ddpm_reverse_pallas.1} parent=1 // pred_check_branch
      %36 = sbr.rel (0) target = $region13
    $region12: #{ddpm_reverse_pallas.1} parent=1 // pred_region
      %s38 = ssub.s32 1024, 1024
      %39 = vsyncadd [#allocation8], %s38
      %s40 = sshll.u32 [#allocation7], 4
      %s41 = int_to_ptr.vmem [resolvable:$true] %s40
      %46 = dma.hbm_to_vmem [thread:$0]  %s2, 1024, %s41, [#allocation8], 64, 64, 4
    $region13: #{ddpm_reverse_pallas.1} parent=1 // pred_fallthru
      _
    // Predicated region
    $region14: #{ddpm_reverse_pallas.1} parent=1 // pred_check
      _
    $region15: #{ddpm_reverse_pallas.1} parent=1 // pred_check_branch
      %48 = sbr.rel (0) target = $region17
    $region16: #{ddpm_reverse_pallas.1} parent=1 // pred_region
      %s50 = ssub.s32 384, 384
      %51 = vsyncadd [#allocation8], %s50
      %s52 = sshll.u32 [#allocation9], 4
      %s53 = int_to_ptr.vmem [resolvable:$true] %s52
      %58 = dma.hbm_to_vmem [thread:$0]  %s3, 384, %s53, [#allocation8], 128, 128, 8
    $region17: #{ddpm_reverse_pallas.1} parent=1 // pred_fallthru
      _
    // Predicated region
    $region18: #{ddpm_reverse_pallas.1} parent=1 // pred_check
      _
    $region19: #{ddpm_reverse_pallas.1} parent=1 // pred_check_branch
      %60 = sbr.rel (0) target = $region21
    $region20: #{ddpm_reverse_pallas.1} parent=1 // pred_region
      %s62 = ssub.s32 2560, 2560
      %63 = vsyncadd [#allocation11], %s62
      %s64 = sshll.u32 [#allocation10], 4
      %s65 = int_to_ptr.vmem [resolvable:$true] %s64
      %70 = dma.hbm_to_vmem [thread:$0]  %s4, 2560, %s65, [#allocation11], 128, 128, 8
    $region21: #{ddpm_reverse_pallas.1} parent=1 // pred_fallthru
      _
    // Predicated region
    $region22: #{ddpm_reverse_pallas.1} parent=1 // pred_check
      _
    $region23: #{ddpm_reverse_pallas.1} parent=1 // pred_check_branch
      %72 = sbr.rel (0) target = $region25
    $region24: #{ddpm_reverse_pallas.1} parent=1 // pred_region
      _
    $region25: #{ddpm_reverse_pallas.1} parent=1 // pred_fallthru
      _
    // Predicated region
    $region26: #{ddpm_reverse_pallas.1} parent=1 // pred_check
      _
    $region27: #{ddpm_reverse_pallas.1} parent=1 // pred_check_branch
      %74 = sbr.rel (0) target = $region29
    $region28: #{ddpm_reverse_pallas.1} parent=1 // pred_region
      _
    $region29: #{ddpm_reverse_pallas.1} parent=1 // pred_fallthru
      _
    // Predicated region
    $region30: #{ddpm_reverse_pallas.1} parent=1 // pred_check
      _
    $region31: #{ddpm_reverse_pallas.1} parent=1 // pred_check_branch
      %76 = sbr.rel (0) target = $region33
    $region32: #{ddpm_reverse_pallas.1} parent=1 // pred_region
      %77 = dma.done [#allocation5], 16
    $region33: #{ddpm_reverse_pallas.1} parent=1 // pred_fallthru
      _
    // Predicated region
    $region34: #{ddpm_reverse_pallas.1} parent=1 // pred_check
      _
    $region35: #{ddpm_reverse_pallas.1} parent=1 // pred_check_branch
      %79 = sbr.rel (0) target = $region37
    $region36: #{ddpm_reverse_pallas.1} parent=1 // pred_region
      %80 = dma.done [#allocation3], 128
    $region37: #{ddpm_reverse_pallas.1} parent=1 // pred_fallthru
      _
    // Predicated region
    $region38: #{ddpm_reverse_pallas.1} parent=1 // pred_check
      _
    $region39: #{ddpm_reverse_pallas.1} parent=1 // pred_check_branch
      %82 = sbr.rel (0) target = $region41
    $region40: #{ddpm_reverse_pallas.1} parent=1 // pred_region
      %83 = dma.done [#allocation8], 1024
    $region41: #{ddpm_reverse_pallas.1} parent=1 // pred_fallthru
      _
    // Predicated region
    $region42: #{ddpm_reverse_pallas.1} parent=1 // pred_check
      _
    $region43: #{ddpm_reverse_pallas.1} parent=1 // pred_check_branch
      %85 = sbr.rel (0) target = $region45
    $region44: #{ddpm_reverse_pallas.1} parent=1 // pred_region
      %86 = dma.done [#allocation8], 384
    $region45: #{ddpm_reverse_pallas.1} parent=1 // pred_fallthru
      _
    // Predicated region
    $region46: #{ddpm_reverse_pallas.1} parent=1 // pred_check
      _
    $region47: #{ddpm_reverse_pallas.1} parent=1 // pred_check_branch
      %88 = sbr.rel (0) target = $region49
    $region48: #{ddpm_reverse_pallas.1} parent=1 // pred_region
      %89 = dma.done [#allocation11], 2560
    $region49: #{ddpm_reverse_pallas.1} parent=1 // pred_fallthru
      _
    %90 = sfence
    %v92 = vld [vmem:[%s5] sm:$0xff]
    %v93 = vld [vmem:[%s6] sm:$0xff]
    %v94 = vld [vmem:[#allocation7] sm:$0xf]
    %v95 = vld [vmem:[#allocation7 + $0x4] sm:$0xf]
    %v96 = vld [vmem:[#allocation7 + $0x8] sm:$0xf]
    %v97 = vld [vmem:[#allocation7 + $0xc] sm:$0xf]
    %v98 = vld [vmem:[#allocation7 + $0x10] sm:$0xf]
    %v99 = vld [vmem:[#allocation7 + $0x14] sm:$0xf]
    %v100 = vld [vmem:[#allocation7 + $0x18] sm:$0xf]
    %v101 = vld [vmem:[#allocation7 + $0x1c] sm:$0xf]
    %v102 = vld [vmem:[#allocation7 + $0x20] sm:$0xf]
    %v103 = vld [vmem:[#allocation7 + $0x24] sm:$0xf]
    %v104 = vld [vmem:[#allocation7 + $0x28] sm:$0xf]
    %v105 = vld [vmem:[#allocation7 + $0x2c] sm:$0xf]
    %v106 = vld [vmem:[#allocation7 + $0x30] sm:$0xf]
    %v107 = vld [vmem:[#allocation7 + $0x34] sm:$0xf]
    %v108 = vld [vmem:[#allocation7 + $0x38] sm:$0xf]
    %v109 = vld [vmem:[#allocation7 + $0x3c] sm:$0xf]
    %v110 = vld [vmem:[#allocation6] sm:$0xff]
    %v111 = vpack.c.bf16 %v110, %v110
    %v112 = vld [vmem:[#allocation9] sm:$0x1]
    %v113 = vlaneseq
    %v114 = vshrl.u32 %v113, 7
    %v115 = vsub.s32 0, %v114
    %v116 = vrot.slane %v112, %v115
    %v133 = vunpack.c.l.b16 %v94
    %v134 = vunpack.c.l.b16 %v95
    %v135 = vunpack.c.l.b16 %v96
    %v136 = vunpack.c.l.b16 %v97
    %v137 = vunpack.c.l.b16 %v98
    %v138 = vunpack.c.l.b16 %v99
    %v139 = vunpack.c.l.b16 %v100
    %v140 = vunpack.c.l.b16 %v101
    %v141 = vunpack.c.l.b16 %v102
    %v142 = vunpack.c.l.b16 %v103
    %v143 = vunpack.c.l.b16 %v104
    %v144 = vunpack.c.l.b16 %v105
    %v145 = vunpack.c.l.b16 %v106
    %v146 = vunpack.c.l.b16 %v107
    %v147 = vunpack.c.l.b16 %v108
    %v148 = vunpack.c.l.b16 %v109
    %v149 = vpack.c.b16 %v134, %v133
    %v150 = vpack.c.b16 %v136, %v135
    %v151 = vpack.c.b16 %v138, %v137
    %v152 = vpack.c.b16 %v140, %v139
    %v153 = vpack.c.b16 %v142, %v141
    %v154 = vpack.c.b16 %v144, %v143
    %v155 = vpack.c.b16 %v146, %v145
    %v156 = vpack.c.b16 %v148, %v147
    %165 = vmatprep.subr.bf16.mxu0 0
    %166 = vmatpush1.bf16.msra.mxu0 %v149
    %167 = vmatprep.subr.bf16.mxu0 0
    %168 = vmatpush1.bf16.msra.mxu0 %v150
    %169 = vmatprep.subr.bf16.mxu0 0
    %170 = vmatpush1.bf16.msra.mxu0 %v151
    %171 = vmatprep.subr.bf16.mxu0 0
    %172 = vmatpush1.bf16.msra.mxu0 %v152
    %173 = vmatprep.subr.bf16.mxu0 0
    %174 = vmatpush1.bf16.msra.mxu0 %v153
    %175 = vmatprep.subr.bf16.mxu0 0
    %176 = vmatpush1.bf16.msra.mxu0 %v154
    %177 = vmatprep.subr.bf16.mxu0 0
    %178 = vmatpush1.bf16.msra.mxu0 %v155
    %179 = vmatprep.subr.bf16.mxu0 0
    %180 = vmatpush1.bf16.msra.mxu0 %v156
    %181 = vmatprep.subr.bf16.mxu0 0
    %182 = vmatpush1.bf16.msra.mxu0 0
    %183 = vmatprep.subr.bf16.mxu0 0
    %184 = vmatpush1.bf16.msra.mxu0 0
    %185 = vmatprep.subr.bf16.mxu0 0
    %186 = vmatpush1.bf16.msra.mxu0 0
    %187 = vmatprep.subr.bf16.mxu0 0
    %188 = vmatpush1.bf16.msra.mxu0 0
    %189 = vmatprep.subr.bf16.mxu0 0
    %190 = vmatpush1.bf16.msra.mxu0 0
    %191 = vmatprep.subr.bf16.mxu0 0
    %192 = vmatpush1.bf16.msra.mxu0 0
    %193 = vmatprep.subr.bf16.mxu0 0
    %194 = vmatpush1.bf16.msra.mxu0 0
    %195 = vmatprep.subr.bf16.mxu0 0
    %196 = vmatpush1.bf16.msra.mxu0 0
    %197 = vmatprep.mubr.bf16.mxu0 0
    %198 = vmatmul.mubr.bf16.gmra.mrb[0].mxu0 %v111
    %v199 = vpop.f32.mrb[0].mxu0
    %v200 = vadd.f32 %v116, %v199
    %v201 = vpop.f32.mrb[0].mxu0
    %v202 = vpop.f32.mrb[0].mxu0
    %v203 = vpop.f32.mrb[0].mxu0
    %204 = vdwg.mxu0
    %s205 = sld [smem:[#allocation2]]
    %s206 = sld [smem:[#allocation2 + $0x1]]
    %s207 = sld [smem:[#allocation2 + $0x2]]
    %v208 = vmax.f32 %v200, -1.0
    %v209 = vmin.f32 %v208, 1.0
    %v210 = vstv %s205
    %v211 = vmul.f32 %v210, %v209
    %v212 = vstv %s206
    %v213 = vmul.f32 %v212, %v110
    %v214 = vadd.f32 %v211, %v213
    %v215 = vld [vmem:[#allocation10] sm:$0xff]
    %v216 = vstv %s207
    %v217 = vmul.f32 %v216, %v215
    %v218 = vadd.f32 %v214, %v217
    %vm219 = vcmp.gt.f32.partialorder %v92, 0.5
    %v220 = vsel %vm219, %v93, %v218
    %v221 = vpack.c.bf16 %v220, %v220
    %v222 = vld [vmem:[#allocation9 + $0x1] sm:$0x1]
    %v223 = vlaneseq
    %v224 = vshrl.u32 %v223, 7
    %v225 = vsub.s32 0, %v224
    %v226 = vrot.slane %v222, %v225
    %227 = vmatprep.subr.bf16.mxu0 0
    %228 = vmatpush1.bf16.msra.mxu0 %v149
    %229 = vmatprep.subr.bf16.mxu0 0
    %230 = vmatpush1.bf16.msra.mxu0 %v150
    %231 = vmatprep.subr.bf16.mxu0 0
    %232 = vmatpush1.bf16.msra.mxu0 %v151
    %233 = vmatprep.subr.bf16.mxu0 0
    %234 = vmatpush1.bf16.msra.mxu0 %v152
    %235 = vmatprep.subr.bf16.mxu0 0
    %236 = vmatpush1.bf16.msra.mxu0 %v153
    %237 = vmatprep.subr.bf16.mxu0 0
    %238 = vmatpush1.bf16.msra.mxu0 %v154
    %239 = vmatprep.subr.bf16.mxu0 0
    %240 = vmatpush1.bf16.msra.mxu0 %v155
    %241 = vmatprep.subr.bf16.mxu0 0
    %242 = vmatpush1.bf16.msra.mxu0 %v156
    %243 = vmatprep.subr.bf16.mxu0 0
    %244 = vmatpush1.bf16.msra.mxu0 0
    %245 = vmatprep.subr.bf16.mxu0 0
    %246 = vmatpush1.bf16.msra.mxu0 0
    %247 = vmatprep.subr.bf16.mxu0 0
    %248 = vmatpush1.bf16.msra.mxu0 0
    %249 = vmatprep.subr.bf16.mxu0 0
    %250 = vmatpush1.bf16.msra.mxu0 0
    %251 = vmatprep.subr.bf16.mxu0 0
    %252 = vmatpush1.bf16.msra.mxu0 0
    %253 = vmatprep.subr.bf16.mxu0 0
    %254 = vmatpush1.bf16.msra.mxu0 0
    %255 = vmatprep.subr.bf16.mxu0 0
    %256 = vmatpush1.bf16.msra.mxu0 0
    %257 = vmatprep.subr.bf16.mxu0 0
    %258 = vmatpush1.bf16.msra.mxu0 0
    %259 = vmatprep.mubr.bf16.mxu0 0
    %260 = vmatmul.mubr.bf16.gmra.mrb[0].mxu0 %v221
    %v261 = vpop.f32.mrb[0].mxu0
    %v262 = vadd.f32 %v226, %v261
    %v263 = vpop.f32.mrb[0].mxu0
    %v264 = vpop.f32.mrb[0].mxu0
    %v265 = vpop.f32.mrb[0].mxu0
    %266 = vdwg.mxu0
    %s267 = sld [smem:[#allocation2 + $0x3]]
    %s268 = sld [smem:[#allocation2 + $0x4]]
    %s269 = sld [smem:[#allocation2 + $0x5]]
    %v270 = vmax.f32 %v262, -1.0
    %v271 = vmin.f32 %v270, 1.0
    %v272 = vstv %s267
    %v273 = vmul.f32 %v272, %v271
    %v274 = vstv %s268
    %v275 = vmul.f32 %v274, %v220
    %v276 = vadd.f32 %v273, %v275
    %s277 = scalar_lea.vmem [#allocation10], 8
    %v278 = vld [vmem:[%s277] sm:$0xff]
    %v279 = vstv %s269
    %v280 = vmul.f32 %v279, %v278
    %v281 = vadd.f32 %v276, %v280
    %v282 = vsel %vm219, %v93, %v281
    %v283 = vpack.c.bf16 %v282, %v282
    %v284 = vld [vmem:[#allocation9 + $0x2] sm:$0x1]
    %v285 = vlaneseq
    %v286 = vshrl.u32 %v285, 7
    %v287 = vsub.s32 0, %v286
    %v288 = vrot.slane %v284, %v287
    %289 = vmatprep.subr.bf16.mxu0 0
    %290 = vmatpush1.bf16.msra.mxu0 %v149
    %291 = vmatprep.subr.bf16.mxu0 0
    %292 = vmatpush1.bf16.msra.mxu0 %v150
    %293 = vmatprep.subr.bf16.mxu0 0
    %294 = vmatpush1.bf16.msra.mxu0 %v151
    %295 = vmatprep.subr.bf16.mxu0 0
    %296 = vmatpush1.bf16.msra.mxu0 %v152
    %297 = vmatprep.subr.bf16.mxu0 0
    %298 = vmatpush1.bf16.msra.mxu0 %v153
    %299 = vmatprep.subr.bf16.mxu0 0
    %300 = vmatpush1.bf16.msra.mxu0 %v154
    %301 = vmatprep.subr.bf16.mxu0 0
    %302 = vmatpush1.bf16.msra.mxu0 %v155
    %303 = vmatprep.subr.bf16.mxu0 0
    %304 = vmatpush1.bf16.msra.mxu0 %v156
    %305 = vmatprep.subr.bf16.mxu0 0
    %306 = vmatpush1.bf16.msra.mxu0 0
    %307 = vmatprep.subr.bf16.mxu0 0
    %308 = vmatpush1.bf16.msra.mxu0 0
    %309 = vmatprep.subr.bf16.mxu0 0
    %310 = vmatpush1.bf16.msra.mxu0 0
    %311 = vmatprep.subr.bf16.mxu0 0
    %312 = vmatpush1.bf16.msra.mxu0 0
    %313 = vmatprep.subr.bf16.mxu0 0
    %314 = vmatpush1.bf16.msra.mxu0 0
    %315 = vmatprep.subr.bf16.mxu0 0
    %316 = vmatpush1.bf16.msra.mxu0 0
    %317 = vmatprep.subr.bf16.mxu0 0
    %318 = vmatpush1.bf16.msra.mxu0 0
    %319 = vmatprep.subr.bf16.mxu0 0
    %320 = vmatpush1.bf16.msra.mxu0 0
    %321 = vmatprep.mubr.bf16.mxu0 0
    %322 = vmatmul.mubr.bf16.gmra.mrb[0].mxu0 %v283
    %v323 = vpop.f32.mrb[0].mxu0
    %v324 = vadd.f32 %v288, %v323
    %v325 = vpop.f32.mrb[0].mxu0
    %v326 = vpop.f32.mrb[0].mxu0
    %v327 = vpop.f32.mrb[0].mxu0
    %328 = vdwg.mxu0
    %s329 = sld [smem:[#allocation2 + $0x6]]
    %s330 = sld [smem:[#allocation2 + $0x7]]
    %s331 = sld [smem:[#allocation2 + $0x8]]
    %v332 = vmax.f32 %v324, -1.0
    %v333 = vmin.f32 %v332, 1.0
    %v334 = vstv %s329
    %v335 = vmul.f32 %v334, %v333
    %v336 = vstv %s330
    %v337 = vmul.f32 %v336, %v282
    %v338 = vadd.f32 %v335, %v337
    %s339 = scalar_lea.vmem [#allocation10], 16
    %v340 = vld [vmem:[%s339] sm:$0xff]
    %v341 = vstv %s331
    %v342 = vmul.f32 %v341, %v340
    %v343 = vadd.f32 %v338, %v342
    %v344 = vsel %vm219, %v93, %v343
    %v345 = vpack.c.bf16 %v344, %v344
    %v346 = vld [vmem:[#allocation9 + $0x3] sm:$0x1]
    %v347 = vlaneseq
    %v348 = vshrl.u32 %v347, 7
    %v349 = vsub.s32 0, %v348
    %v350 = vrot.slane %v346, %v349
    %351 = vmatprep.subr.bf16.mxu0 0
    %352 = vmatpush1.bf16.msra.mxu0 %v149
    %353 = vmatprep.subr.bf16.mxu0 0
    %354 = vmatpush1.bf16.msra.mxu0 %v150
    %355 = vmatprep.subr.bf16.mxu0 0
    %356 = vmatpush1.bf16.msra.mxu0 %v151
    %357 = vmatprep.subr.bf16.mxu0 0
    %358 = vmatpush1.bf16.msra.mxu0 %v152
    %359 = vmatprep.subr.bf16.mxu0 0
    %360 = vmatpush1.bf16.msra.mxu0 %v153
    %361 = vmatprep.subr.bf16.mxu0 0
    %362 = vmatpush1.bf16.msra.mxu0 %v154
    %363 = vmatprep.subr.bf16.mxu0 0
    %364 = vmatpush1.bf16.msra.mxu0 %v155
    %365 = vmatprep.subr.bf16.mxu0 0
    %366 = vmatpush1.bf16.msra.mxu0 %v156
    %367 = vmatprep.subr.bf16.mxu0 0
    %368 = vmatpush1.bf16.msra.mxu0 0
    %369 = vmatprep.subr.bf16.mxu0 0
    %370 = vmatpush1.bf16.msra.mxu0 0
    %371 = vmatprep.subr.bf16.mxu0 0
    %372 = vmatpush1.bf16.msra.mxu0 0
    %373 = vmatprep.subr.bf16.mxu0 0
    %374 = vmatpush1.bf16.msra.mxu0 0
    %375 = vmatprep.subr.bf16.mxu0 0
    %376 = vmatpush1.bf16.msra.mxu0 0
    %377 = vmatprep.subr.bf16.mxu0 0
    %378 = vmatpush1.bf16.msra.mxu0 0
    %379 = vmatprep.subr.bf16.mxu0 0
    %380 = vmatpush1.bf16.msra.mxu0 0
    %381 = vmatprep.subr.bf16.mxu0 0
    %382 = vmatpush1.bf16.msra.mxu0 0
    %383 = vmatprep.mubr.bf16.mxu0 0
    %384 = vmatmul.mubr.bf16.gmra.mrb[0].mxu0 %v345
    %v385 = vpop.f32.mrb[0].mxu0
    %v386 = vadd.f32 %v350, %v385
    %v387 = vpop.f32.mrb[0].mxu0
    %v388 = vpop.f32.mrb[0].mxu0
    %v389 = vpop.f32.mrb[0].mxu0
    %390 = vdwg.mxu0
    %s391 = sld [smem:[#allocation2 + $0x9]]
    %s392 = sld [smem:[#allocation2 + $0xa]]
    %s393 = sld [smem:[#allocation2 + $0xb]]
    %v394 = vmax.f32 %v386, -1.0
    %v395 = vmin.f32 %v394, 1.0
    %v396 = vstv %s391
    %v397 = vmul.f32 %v396, %v395
    %v398 = vstv %s392
    %v399 = vmul.f32 %v398, %v344
    %v400 = vadd.f32 %v397, %v399
    %s401 = scalar_lea.vmem [#allocation10], 24
    %v402 = vld [vmem:[%s401] sm:$0xff]
    %v403 = vstv %s393
    %v404 = vmul.f32 %v403, %v402
    %v405 = vadd.f32 %v400, %v404
    %v406 = vsel %vm219, %v93, %v405
    %v407 = vpack.c.bf16 %v406, %v406
    %v408 = vld [vmem:[#allocation9 + $0x4] sm:$0x1]
    %v409 = vlaneseq
    %v410 = vshrl.u32 %v409, 7
    %v411 = vsub.s32 0, %v410
    %v412 = vrot.slane %v408, %v411
    %413 = vmatprep.subr.bf16.mxu0 0
    %414 = vmatpush1.bf16.msra.mxu0 %v149
    %415 = vmatprep.subr.bf16.mxu0 0
    %416 = vmatpush1.bf16.msra.mxu0 %v150
    %417 = vmatprep.subr.bf16.mxu0 0
    %418 = vmatpush1.bf16.msra.mxu0 %v151
    %419 = vmatprep.subr.bf16.mxu0 0
    %420 = vmatpush1.bf16.msra.mxu0 %v152
    %421 = vmatprep.subr.bf16.mxu0 0
    %422 = vmatpush1.bf16.msra.mxu0 %v153
    %423 = vmatprep.subr.bf16.mxu0 0
    %424 = vmatpush1.bf16.msra.mxu0 %v154
    %425 = vmatprep.subr.bf16.mxu0 0
    %426 = vmatpush1.bf16.msra.mxu0 %v155
    %427 = vmatprep.subr.bf16.mxu0 0
    %428 = vmatpush1.bf16.msra.mxu0 %v156
    %429 = vmatprep.subr.bf16.mxu0 0
    %430 = vmatpush1.bf16.msra.mxu0 0
    %431 = vmatprep.subr.bf16.mxu0 0
    %432 = vmatpush1.bf16.msra.mxu0 0
    %433 = vmatprep.subr.bf16.mxu0 0
    %434 = vmatpush1.bf16.msra.mxu0 0
    %435 = vmatprep.subr.bf16.mxu0 0
    %436 = vmatpush1.bf16.msra.mxu0 0
    %437 = vmatprep.subr.bf16.mxu0 0
    %438 = vmatpush1.bf16.msra.mxu0 0
    %439 = vmatprep.subr.bf16.mxu0 0
    %440 = vmatpush1.bf16.msra.mxu0 0
    %441 = vmatprep.subr.bf16.mxu0 0
    %442 = vmatpush1.bf16.msra.mxu0 0
    %443 = vmatprep.subr.bf16.mxu0 0
    %444 = vmatpush1.bf16.msra.mxu0 0
    %445 = vmatprep.mubr.bf16.mxu0 0
    %446 = vmatmul.mubr.bf16.gmra.mrb[0].mxu0 %v407
    %v447 = vpop.f32.mrb[0].mxu0
    %v448 = vadd.f32 %v412, %v447
    %v449 = vpop.f32.mrb[0].mxu0
    %v450 = vpop.f32.mrb[0].mxu0
    %v451 = vpop.f32.mrb[0].mxu0
    %452 = vdwg.mxu0
    %s453 = sld [smem:[#allocation2 + $0xc]]
    %s454 = sld [smem:[#allocation2 + $0xd]]
    %s455 = sld [smem:[#allocation2 + $0xe]]
    %v456 = vmax.f32 %v448, -1.0
    %v457 = vmin.f32 %v456, 1.0
    %v458 = vstv %s453
    %v459 = vmul.f32 %v458, %v457
    %v460 = vstv %s454
    %v461 = vmul.f32 %v460, %v406
    %v462 = vadd.f32 %v459, %v461
    %s463 = scalar_lea.vmem [#allocation10], 32
    %v464 = vld [vmem:[%s463] sm:$0xff]
    %v465 = vstv %s455
    %v466 = vmul.f32 %v465, %v464
    %v467 = vadd.f32 %v462, %v466
    %v468 = vsel %vm219, %v93, %v467
    %v469 = vpack.c.bf16 %v468, %v468
    %v470 = vld [vmem:[#allocation9 + $0x5] sm:$0x1]
    %v471 = vlaneseq
    %v472 = vshrl.u32 %v471, 7
    %v473 = vsub.s32 0, %v472
    %v474 = vrot.slane %v470, %v473
    %475 = vmatprep.subr.bf16.mxu0 0
    %476 = vmatpush1.bf16.msra.mxu0 %v149
    %477 = vmatprep.subr.bf16.mxu0 0
    %478 = vmatpush1.bf16.msra.mxu0 %v150
    %479 = vmatprep.subr.bf16.mxu0 0
    %480 = vmatpush1.bf16.msra.mxu0 %v151
    %481 = vmatprep.subr.bf16.mxu0 0
    %482 = vmatpush1.bf16.msra.mxu0 %v152
    %483 = vmatprep.subr.bf16.mxu0 0
    %484 = vmatpush1.bf16.msra.mxu0 %v153
    %485 = vmatprep.subr.bf16.mxu0 0
    %486 = vmatpush1.bf16.msra.mxu0 %v154
    %487 = vmatprep.subr.bf16.mxu0 0
    %488 = vmatpush1.bf16.msra.mxu0 %v155
    %489 = vmatprep.subr.bf16.mxu0 0
    %490 = vmatpush1.bf16.msra.mxu0 %v156
    %491 = vmatprep.subr.bf16.mxu0 0
    %492 = vmatpush1.bf16.msra.mxu0 0
    %493 = vmatprep.subr.bf16.mxu0 0
    %494 = vmatpush1.bf16.msra.mxu0 0
    %495 = vmatprep.subr.bf16.mxu0 0
    %496 = vmatpush1.bf16.msra.mxu0 0
    %497 = vmatprep.subr.bf16.mxu0 0
    %498 = vmatpush1.bf16.msra.mxu0 0
    %499 = vmatprep.subr.bf16.mxu0 0
    %500 = vmatpush1.bf16.msra.mxu0 0
    %501 = vmatprep.subr.bf16.mxu0 0
    %502 = vmatpush1.bf16.msra.mxu0 0
    %503 = vmatprep.subr.bf16.mxu0 0
    %504 = vmatpush1.bf16.msra.mxu0 0
    %505 = vmatprep.subr.bf16.mxu0 0
    %506 = vmatpush1.bf16.msra.mxu0 0
    %507 = vmatprep.mubr.bf16.mxu0 0
    %508 = vmatmul.mubr.bf16.gmra.mrb[0].mxu0 %v469
    %v509 = vpop.f32.mrb[0].mxu0
    %v510 = vadd.f32 %v474, %v509
    %v511 = vpop.f32.mrb[0].mxu0
    %v512 = vpop.f32.mrb[0].mxu0
    %v513 = vpop.f32.mrb[0].mxu0
    %514 = vdwg.mxu0
    %s515 = sld [smem:[#allocation2 + $0xf]]
    %s516 = sld [smem:[#allocation2 + $0x10]]
    %s517 = sld [smem:[#allocation2 + $0x11]]
    %v518 = vmax.f32 %v510, -1.0
    %v519 = vmin.f32 %v518, 1.0
    %v520 = vstv %s515
    %v521 = vmul.f32 %v520, %v519
    %v522 = vstv %s516
    %v523 = vmul.f32 %v522, %v468
    %v524 = vadd.f32 %v521, %v523
    %s525 = scalar_lea.vmem [#allocation10], 40
    %v526 = vld [vmem:[%s525] sm:$0xff]
    %v527 = vstv %s517
    %v528 = vmul.f32 %v527, %v526
    %v529 = vadd.f32 %v524, %v528
    %v530 = vsel %vm219, %v93, %v529
    %v531 = vpack.c.bf16 %v530, %v530
    %v532 = vld [vmem:[#allocation9 + $0x6] sm:$0x1]
    %v533 = vlaneseq
    %v534 = vshrl.u32 %v533, 7
    %v535 = vsub.s32 0, %v534
    %v536 = vrot.slane %v532, %v535
    %537 = vmatprep.subr.bf16.mxu0 0
    %538 = vmatpush1.bf16.msra.mxu0 %v149
    %539 = vmatprep.subr.bf16.mxu0 0
    %540 = vmatpush1.bf16.msra.mxu0 %v150
    %541 = vmatprep.subr.bf16.mxu0 0
    %542 = vmatpush1.bf16.msra.mxu0 %v151
    %543 = vmatprep.subr.bf16.mxu0 0
    %544 = vmatpush1.bf16.msra.mxu0 %v152
    %545 = vmatprep.subr.bf16.mxu0 0
    %546 = vmatpush1.bf16.msra.mxu0 %v153
    %547 = vmatprep.subr.bf16.mxu0 0
    %548 = vmatpush1.bf16.msra.mxu0 %v154
    %549 = vmatprep.subr.bf16.mxu0 0
    %550 = vmatpush1.bf16.msra.mxu0 %v155
    %551 = vmatprep.subr.bf16.mxu0 0
    %552 = vmatpush1.bf16.msra.mxu0 %v156
    %553 = vmatprep.subr.bf16.mxu0 0
    %554 = vmatpush1.bf16.msra.mxu0 0
    %555 = vmatprep.subr.bf16.mxu0 0
    %556 = vmatpush1.bf16.msra.mxu0 0
    %557 = vmatprep.subr.bf16.mxu0 0
    %558 = vmatpush1.bf16.msra.mxu0 0
    %559 = vmatprep.subr.bf16.mxu0 0
    %560 = vmatpush1.bf16.msra.mxu0 0
    %561 = vmatprep.subr.bf16.mxu0 0
    %562 = vmatpush1.bf16.msra.mxu0 0
    %563 = vmatprep.subr.bf16.mxu0 0
    %564 = vmatpush1.bf16.msra.mxu0 0
    %565 = vmatprep.subr.bf16.mxu0 0
    %566 = vmatpush1.bf16.msra.mxu0 0
    %567 = vmatprep.subr.bf16.mxu0 0
    %568 = vmatpush1.bf16.msra.mxu0 0
    %569 = vmatprep.mubr.bf16.mxu0 0
    %570 = vmatmul.mubr.bf16.gmra.mrb[0].mxu0 %v531
    %v571 = vpop.f32.mrb[0].mxu0
    %v572 = vadd.f32 %v536, %v571
    %v573 = vpop.f32.mrb[0].mxu0
    %v574 = vpop.f32.mrb[0].mxu0
    %v575 = vpop.f32.mrb[0].mxu0
    %576 = vdwg.mxu0
    %s577 = sld [smem:[#allocation2 + $0x12]]
    %s578 = sld [smem:[#allocation2 + $0x13]]
    %s579 = sld [smem:[#allocation2 + $0x14]]
    %v580 = vmax.f32 %v572, -1.0
    %v581 = vmin.f32 %v580, 1.0
    %v582 = vstv %s577
    %v583 = vmul.f32 %v582, %v581
    %v584 = vstv %s578
    %v585 = vmul.f32 %v584, %v530
    %v586 = vadd.f32 %v583, %v585
    %s587 = scalar_lea.vmem [#allocation10], 48
    %v588 = vld [vmem:[%s587] sm:$0xff]
    %v589 = vstv %s579
    %v590 = vmul.f32 %v589, %v588
    %v591 = vadd.f32 %v586, %v590
    %v592 = vsel %vm219, %v93, %v591
    %v593 = vpack.c.bf16 %v592, %v592
    %v594 = vld [vmem:[#allocation9 + $0x7] sm:$0x1]
    %v595 = vlaneseq
    %v596 = vshrl.u32 %v595, 7
    %v597 = vsub.s32 0, %v596
    %v598 = vrot.slane %v594, %v597
    %599 = vmatprep.subr.bf16.mxu0 0
    %600 = vmatpush1.bf16.msra.mxu0 %v149
    %601 = vmatprep.subr.bf16.mxu0 0
    %602 = vmatpush1.bf16.msra.mxu0 %v150
    %603 = vmatprep.subr.bf16.mxu0 0
    %604 = vmatpush1.bf16.msra.mxu0 %v151
    %605 = vmatprep.subr.bf16.mxu0 0
    %606 = vmatpush1.bf16.msra.mxu0 %v152
    %607 = vmatprep.subr.bf16.mxu0 0
    %608 = vmatpush1.bf16.msra.mxu0 %v153
    %609 = vmatprep.subr.bf16.mxu0 0
    %610 = vmatpush1.bf16.msra.mxu0 %v154
    %611 = vmatprep.subr.bf16.mxu0 0
    %612 = vmatpush1.bf16.msra.mxu0 %v155
    %613 = vmatprep.subr.bf16.mxu0 0
    %614 = vmatpush1.bf16.msra.mxu0 %v156
    %615 = vmatprep.subr.bf16.mxu0 0
    %616 = vmatpush1.bf16.msra.mxu0 0
    %617 = vmatprep.subr.bf16.mxu0 0
    %618 = vmatpush1.bf16.msra.mxu0 0
    %619 = vmatprep.subr.bf16.mxu0 0
    %620 = vmatpush1.bf16.msra.mxu0 0
    %621 = vmatprep.subr.bf16.mxu0 0
    %622 = vmatpush1.bf16.msra.mxu0 0
    %623 = vmatprep.subr.bf16.mxu0 0
    %624 = vmatpush1.bf16.msra.mxu0 0
    %625 = vmatprep.subr.bf16.mxu0 0
    %626 = vmatpush1.bf16.msra.mxu0 0
    %627 = vmatprep.subr.bf16.mxu0 0
    %628 = vmatpush1.bf16.msra.mxu0 0
    %629 = vmatprep.subr.bf16.mxu0 0
    %630 = vmatpush1.bf16.msra.mxu0 0
    %631 = vmatprep.mubr.bf16.mxu0 0
    %632 = vmatmul.mubr.bf16.gmra.mrb[0].mxu0 %v593
    %v633 = vpop.f32.mrb[0].mxu0
    %v634 = vadd.f32 %v598, %v633
    %v635 = vpop.f32.mrb[0].mxu0
    %v636 = vpop.f32.mrb[0].mxu0
    %v637 = vpop.f32.mrb[0].mxu0
    %638 = vdwg.mxu0
    %s639 = sld [smem:[#allocation2 + $0x15]]
    %s640 = sld [smem:[#allocation2 + $0x16]]
    %s641 = sld [smem:[#allocation2 + $0x17]]
    %v642 = vmax.f32 %v634, -1.0
    %v643 = vmin.f32 %v642, 1.0
    %v644 = vstv %s639
    %v645 = vmul.f32 %v644, %v643
    %v646 = vstv %s640
    %v647 = vmul.f32 %v646, %v592
    %v648 = vadd.f32 %v645, %v647
    %s649 = scalar_lea.vmem [#allocation10], 56
    %v650 = vld [vmem:[%s649] sm:$0xff]
    %v651 = vstv %s641
    %v652 = vmul.f32 %v651, %v650
    %v653 = vadd.f32 %v648, %v652
    %v654 = vsel %vm219, %v93, %v653
    %v655 = vpack.c.bf16 %v654, %v654
    %v656 = vld [vmem:[#allocation9 + $0x8] sm:$0x1]
    %v657 = vlaneseq
    %v658 = vshrl.u32 %v657, 7
    %v659 = vsub.s32 0, %v658
    %v660 = vrot.slane %v656, %v659
    %661 = vmatprep.subr.bf16.mxu0 0
    %662 = vmatpush1.bf16.msra.mxu0 %v149
    %663 = vmatprep.subr.bf16.mxu0 0
    %664 = vmatpush1.bf16.msra.mxu0 %v150
    %665 = vmatprep.subr.bf16.mxu0 0
    %666 = vmatpush1.bf16.msra.mxu0 %v151
    %667 = vmatprep.subr.bf16.mxu0 0
    %668 = vmatpush1.bf16.msra.mxu0 %v152
    %669 = vmatprep.subr.bf16.mxu0 0
    %670 = vmatpush1.bf16.msra.mxu0 %v153
    %671 = vmatprep.subr.bf16.mxu0 0
    %672 = vmatpush1.bf16.msra.mxu0 %v154
    %673 = vmatprep.subr.bf16.mxu0 0
    %674 = vmatpush1.bf16.msra.mxu0 %v155
    %675 = vmatprep.subr.bf16.mxu0 0
    %676 = vmatpush1.bf16.msra.mxu0 %v156
    %677 = vmatprep.subr.bf16.mxu0 0
    %678 = vmatpush1.bf16.msra.mxu0 0
    %679 = vmatprep.subr.bf16.mxu0 0
    %680 = vmatpush1.bf16.msra.mxu0 0
    %681 = vmatprep.subr.bf16.mxu0 0
    %682 = vmatpush1.bf16.msra.mxu0 0
    %683 = vmatprep.subr.bf16.mxu0 0
    %684 = vmatpush1.bf16.msra.mxu0 0
    %685 = vmatprep.subr.bf16.mxu0 0
    %686 = vmatpush1.bf16.msra.mxu0 0
    %687 = vmatprep.subr.bf16.mxu0 0
    %688 = vmatpush1.bf16.msra.mxu0 0
    %689 = vmatprep.subr.bf16.mxu0 0
    %690 = vmatpush1.bf16.msra.mxu0 0
    %691 = vmatprep.subr.bf16.mxu0 0
    %692 = vmatpush1.bf16.msra.mxu0 0
    %693 = vmatprep.mubr.bf16.mxu0 0
    %694 = vmatmul.mubr.bf16.gmra.mrb[0].mxu0 %v655
    %v695 = vpop.f32.mrb[0].mxu0
    %v696 = vadd.f32 %v660, %v695
    %v697 = vpop.f32.mrb[0].mxu0
    %v698 = vpop.f32.mrb[0].mxu0
    %v699 = vpop.f32.mrb[0].mxu0
    %700 = vdwg.mxu0
    %s701 = sld [smem:[#allocation2 + $0x18]]
    %s702 = sld [smem:[#allocation2 + $0x19]]
    %s703 = sld [smem:[#allocation2 + $0x1a]]
    %v704 = vmax.f32 %v696, -1.0
    %v705 = vmin.f32 %v704, 1.0
    %v706 = vstv %s701
    %v707 = vmul.f32 %v706, %v705
    %v708 = vstv %s702
    %v709 = vmul.f32 %v708, %v654
    %v710 = vadd.f32 %v707, %v709
    %s711 = scalar_lea.vmem [#allocation10], 64
    %v712 = vld [vmem:[%s711] sm:$0xff]
    %v713 = vstv %s703
    %v714 = vmul.f32 %v713, %v712
    %v715 = vadd.f32 %v710, %v714
    %v716 = vsel %vm219, %v93, %v715
    %v717 = vpack.c.bf16 %v716, %v716
    %v718 = vld [vmem:[#allocation9 + $0x9] sm:$0x1]
    %v719 = vlaneseq
    %v720 = vshrl.u32 %v719, 7
    %v721 = vsub.s32 0, %v720
    %v722 = vrot.slane %v718, %v721
    %723 = vmatprep.subr.bf16.mxu0 0
    %724 = vmatpush1.bf16.msra.mxu0 %v149
    %725 = vmatprep.subr.bf16.mxu0 0
    %726 = vmatpush1.bf16.msra.mxu0 %v150
    %727 = vmatprep.subr.bf16.mxu0 0
    %728 = vmatpush1.bf16.msra.mxu0 %v151
    %729 = vmatprep.subr.bf16.mxu0 0
    %730 = vmatpush1.bf16.msra.mxu0 %v152
    %731 = vmatprep.subr.bf16.mxu0 0
    %732 = vmatpush1.bf16.msra.mxu0 %v153
    %733 = vmatprep.subr.bf16.mxu0 0
    %734 = vmatpush1.bf16.msra.mxu0 %v154
    %735 = vmatprep.subr.bf16.mxu0 0
    %736 = vmatpush1.bf16.msra.mxu0 %v155
    %737 = vmatprep.subr.bf16.mxu0 0
    %738 = vmatpush1.bf16.msra.mxu0 %v156
    %739 = vmatprep.subr.bf16.mxu0 0
    %740 = vmatpush1.bf16.msra.mxu0 0
    %741 = vmatprep.subr.bf16.mxu0 0
    %742 = vmatpush1.bf16.msra.mxu0 0
    %743 = vmatprep.subr.bf16.mxu0 0
    %744 = vmatpush1.bf16.msra.mxu0 0
    %745 = vmatprep.subr.bf16.mxu0 0
    %746 = vmatpush1.bf16.msra.mxu0 0
    %747 = vmatprep.subr.bf16.mxu0 0
    %748 = vmatpush1.bf16.msra.mxu0 0
    %749 = vmatprep.subr.bf16.mxu0 0
    %750 = vmatpush1.bf16.msra.mxu0 0
    %751 = vmatprep.subr.bf16.mxu0 0
    %752 = vmatpush1.bf16.msra.mxu0 0
    %753 = vmatprep.subr.bf16.mxu0 0
    %754 = vmatpush1.bf16.msra.mxu0 0
    %755 = vmatprep.mubr.bf16.mxu0 0
    %756 = vmatmul.mubr.bf16.gmra.mrb[0].mxu0 %v717
    %v757 = vpop.f32.mrb[0].mxu0
    %v758 = vadd.f32 %v722, %v757
    %v759 = vpop.f32.mrb[0].mxu0
    %v760 = vpop.f32.mrb[0].mxu0
    %v761 = vpop.f32.mrb[0].mxu0
    %762 = vdwg.mxu0
    %s763 = sld [smem:[#allocation2 + $0x1b]]
    %s764 = sld [smem:[#allocation2 + $0x1c]]
    %s765 = sld [smem:[#allocation2 + $0x1d]]
    %v766 = vmax.f32 %v758, -1.0
    %v767 = vmin.f32 %v766, 1.0
    %v768 = vstv %s763
    %v769 = vmul.f32 %v768, %v767
    %v770 = vstv %s764
    %v771 = vmul.f32 %v770, %v716
    %v772 = vadd.f32 %v769, %v771
    %s773 = scalar_lea.vmem [#allocation10], 72
    %v774 = vld [vmem:[%s773] sm:$0xff]
    %v775 = vstv %s765
    %v776 = vmul.f32 %v775, %v774
    %v777 = vadd.f32 %v772, %v776
    %v778 = vsel %vm219, %v93, %v777
    %v779 = vpack.c.bf16 %v778, %v778
    %v780 = vld [vmem:[#allocation9 + $0xa] sm:$0x1]
    %v781 = vlaneseq
    %v782 = vshrl.u32 %v781, 7
    %v783 = vsub.s32 0, %v782
    %v784 = vrot.slane %v780, %v783
    %785 = vmatprep.subr.bf16.mxu0 0
    %786 = vmatpush1.bf16.msra.mxu0 %v149
    %787 = vmatprep.subr.bf16.mxu0 0
    %788 = vmatpush1.bf16.msra.mxu0 %v150
    %789 = vmatprep.subr.bf16.mxu0 0
    %790 = vmatpush1.bf16.msra.mxu0 %v151
    %791 = vmatprep.subr.bf16.mxu0 0
    %792 = vmatpush1.bf16.msra.mxu0 %v152
    %793 = vmatprep.subr.bf16.mxu0 0
    %794 = vmatpush1.bf16.msra.mxu0 %v153
    %795 = vmatprep.subr.bf16.mxu0 0
    %796 = vmatpush1.bf16.msra.mxu0 %v154
    %797 = vmatprep.subr.bf16.mxu0 0
    %798 = vmatpush1.bf16.msra.mxu0 %v155
    %799 = vmatprep.subr.bf16.mxu0 0
    %800 = vmatpush1.bf16.msra.mxu0 %v156
    %801 = vmatprep.subr.bf16.mxu0 0
    %802 = vmatpush1.bf16.msra.mxu0 0
    %803 = vmatprep.subr.bf16.mxu0 0
    %804 = vmatpush1.bf16.msra.mxu0 0
    %805 = vmatprep.subr.bf16.mxu0 0
    %806 = vmatpush1.bf16.msra.mxu0 0
    %807 = vmatprep.subr.bf16.mxu0 0
    %808 = vmatpush1.bf16.msra.mxu0 0
    %809 = vmatprep.subr.bf16.mxu0 0
    %810 = vmatpush1.bf16.msra.mxu0 0
    %811 = vmatprep.subr.bf16.mxu0 0
    %812 = vmatpush1.bf16.msra.mxu0 0
    %813 = vmatprep.subr.bf16.mxu0 0
    %814 = vmatpush1.bf16.msra.mxu0 0
    %815 = vmatprep.subr.bf16.mxu0 0
    %816 = vmatpush1.bf16.msra.mxu0 0
    %817 = vmatprep.mubr.bf16.mxu0 0
    %818 = vmatmul.mubr.bf16.gmra.mrb[0].mxu0 %v779
    %v819 = vpop.f32.mrb[0].mxu0
    %v820 = vadd.f32 %v784, %v819
    %v821 = vpop.f32.mrb[0].mxu0
    %v822 = vpop.f32.mrb[0].mxu0
    %v823 = vpop.f32.mrb[0].mxu0
    %824 = vdwg.mxu0
    %s825 = sld [smem:[#allocation2 + $0x1e]]
    %s826 = sld [smem:[#allocation2 + $0x1f]]
    %s827 = sld [smem:[#allocation2 + $0x20]]
    %v828 = vmax.f32 %v820, -1.0
    %v829 = vmin.f32 %v828, 1.0
    %v830 = vstv %s825
    %v831 = vmul.f32 %v830, %v829
    %v832 = vstv %s826
    %v833 = vmul.f32 %v832, %v778
    %v834 = vadd.f32 %v831, %v833
    %s835 = scalar_lea.vmem [#allocation10], 80
    %v836 = vld [vmem:[%s835] sm:$0xff]
    %v837 = vstv %s827
    %v838 = vmul.f32 %v837, %v836
    %v839 = vadd.f32 %v834, %v838
    %v840 = vsel %vm219, %v93, %v839
    %v841 = vpack.c.bf16 %v840, %v840
    %v842 = vld [vmem:[#allocation9 + $0xb] sm:$0x1]
    %v843 = vlaneseq
    %v844 = vshrl.u32 %v843, 7
    %v845 = vsub.s32 0, %v844
    %v846 = vrot.slane %v842, %v845
    %847 = vmatprep.subr.bf16.mxu0 0
    %848 = vmatpush1.bf16.msra.mxu0 %v149
    %849 = vmatprep.subr.bf16.mxu0 0
    %850 = vmatpush1.bf16.msra.mxu0 %v150
    %851 = vmatprep.subr.bf16.mxu0 0
    %852 = vmatpush1.bf16.msra.mxu0 %v151
    %853 = vmatprep.subr.bf16.mxu0 0
    %854 = vmatpush1.bf16.msra.mxu0 %v152
    %855 = vmatprep.subr.bf16.mxu0 0
    %856 = vmatpush1.bf16.msra.mxu0 %v153
    %857 = vmatprep.subr.bf16.mxu0 0
    %858 = vmatpush1.bf16.msra.mxu0 %v154
    %859 = vmatprep.subr.bf16.mxu0 0
    %860 = vmatpush1.bf16.msra.mxu0 %v155
    %861 = vmatprep.subr.bf16.mxu0 0
    %862 = vmatpush1.bf16.msra.mxu0 %v156
    %863 = vmatprep.subr.bf16.mxu0 0
    %864 = vmatpush1.bf16.msra.mxu0 0
    %865 = vmatprep.subr.bf16.mxu0 0
    %866 = vmatpush1.bf16.msra.mxu0 0
    %867 = vmatprep.subr.bf16.mxu0 0
    %868 = vmatpush1.bf16.msra.mxu0 0
    %869 = vmatprep.subr.bf16.mxu0 0
    %870 = vmatpush1.bf16.msra.mxu0 0
    %871 = vmatprep.subr.bf16.mxu0 0
    %872 = vmatpush1.bf16.msra.mxu0 0
    %873 = vmatprep.subr.bf16.mxu0 0
    %874 = vmatpush1.bf16.msra.mxu0 0
    %875 = vmatprep.subr.bf16.mxu0 0
    %876 = vmatpush1.bf16.msra.mxu0 0
    %877 = vmatprep.subr.bf16.mxu0 0
    %878 = vmatpush1.bf16.msra.mxu0 0
    %879 = vmatprep.mubr.bf16.mxu0 0
    %880 = vmatmul.mubr.bf16.gmra.mrb[0].mxu0 %v841
    %v881 = vpop.f32.mrb[0].mxu0
    %v882 = vadd.f32 %v846, %v881
    %v883 = vpop.f32.mrb[0].mxu0
    %v884 = vpop.f32.mrb[0].mxu0
    %v885 = vpop.f32.mrb[0].mxu0
    %886 = vdwg.mxu0
    %s887 = sld [smem:[#allocation2 + $0x21]]
    %s888 = sld [smem:[#allocation2 + $0x22]]
    %s889 = sld [smem:[#allocation2 + $0x23]]
    %v890 = vmax.f32 %v882, -1.0
    %v891 = vmin.f32 %v890, 1.0
    %v892 = vstv %s887
    %v893 = vmul.f32 %v892, %v891
    %v894 = vstv %s888
    %v895 = vmul.f32 %v894, %v840
    %v896 = vadd.f32 %v893, %v895
    %s897 = scalar_lea.vmem [#allocation10], 88
    %v898 = vld [vmem:[%s897] sm:$0xff]
    %v899 = vstv %s889
    %v900 = vmul.f32 %v899, %v898
    %v901 = vadd.f32 %v896, %v900
    %v902 = vsel %vm219, %v93, %v901
    %v903 = vpack.c.bf16 %v902, %v902
    %v904 = vld [vmem:[#allocation9 + $0xc] sm:$0x1]
    %v905 = vlaneseq
    %v906 = vshrl.u32 %v905, 7
    %v907 = vsub.s32 0, %v906
    %v908 = vrot.slane %v904, %v907
    %909 = vmatprep.subr.bf16.mxu0 0
    %910 = vmatpush1.bf16.msra.mxu0 %v149
    %911 = vmatprep.subr.bf16.mxu0 0
    %912 = vmatpush1.bf16.msra.mxu0 %v150
    %913 = vmatprep.subr.bf16.mxu0 0
    %914 = vmatpush1.bf16.msra.mxu0 %v151
    %915 = vmatprep.subr.bf16.mxu0 0
    %916 = vmatpush1.bf16.msra.mxu0 %v152
    %917 = vmatprep.subr.bf16.mxu0 0
    %918 = vmatpush1.bf16.msra.mxu0 %v153
    %919 = vmatprep.subr.bf16.mxu0 0
    %920 = vmatpush1.bf16.msra.mxu0 %v154
    %921 = vmatprep.subr.bf16.mxu0 0
    %922 = vmatpush1.bf16.msra.mxu0 %v155
    %923 = vmatprep.subr.bf16.mxu0 0
    %924 = vmatpush1.bf16.msra.mxu0 %v156
    %925 = vmatprep.subr.bf16.mxu0 0
    %926 = vmatpush1.bf16.msra.mxu0 0
    %927 = vmatprep.subr.bf16.mxu0 0
    %928 = vmatpush1.bf16.msra.mxu0 0
    %929 = vmatprep.subr.bf16.mxu0 0
    %930 = vmatpush1.bf16.msra.mxu0 0
    %931 = vmatprep.subr.bf16.mxu0 0
    %932 = vmatpush1.bf16.msra.mxu0 0
    %933 = vmatprep.subr.bf16.mxu0 0
    %934 = vmatpush1.bf16.msra.mxu0 0
    %935 = vmatprep.subr.bf16.mxu0 0
    %936 = vmatpush1.bf16.msra.mxu0 0
    %937 = vmatprep.subr.bf16.mxu0 0
    %938 = vmatpush1.bf16.msra.mxu0 0
    %939 = vmatprep.subr.bf16.mxu0 0
    %940 = vmatpush1.bf16.msra.mxu0 0
    %941 = vmatprep.mubr.bf16.mxu0 0
    %942 = vmatmul.mubr.bf16.gmra.mrb[0].mxu0 %v903
    %v943 = vpop.f32.mrb[0].mxu0
    %v944 = vadd.f32 %v908, %v943
    %v945 = vpop.f32.mrb[0].mxu0
    %v946 = vpop.f32.mrb[0].mxu0
    %v947 = vpop.f32.mrb[0].mxu0
    %948 = vdwg.mxu0
    %s949 = sld [smem:[#allocation2 + $0x24]]
    %s950 = sld [smem:[#allocation2 + $0x25]]
    %s951 = sld [smem:[#allocation2 + $0x26]]
    %v952 = vmax.f32 %v944, -1.0
    %v953 = vmin.f32 %v952, 1.0
    %v954 = vstv %s949
    %v955 = vmul.f32 %v954, %v953
    %v956 = vstv %s950
    %v957 = vmul.f32 %v956, %v902
    %v958 = vadd.f32 %v955, %v957
    %s959 = scalar_lea.vmem [#allocation10], 96
    %v960 = vld [vmem:[%s959] sm:$0xff]
    %v961 = vstv %s951
    %v962 = vmul.f32 %v961, %v960
    %v963 = vadd.f32 %v958, %v962
    %v964 = vsel %vm219, %v93, %v963
    %v965 = vpack.c.bf16 %v964, %v964
    %v966 = vld [vmem:[#allocation9 + $0xd] sm:$0x1]
    %v967 = vlaneseq
    %v968 = vshrl.u32 %v967, 7
    %v969 = vsub.s32 0, %v968
    %v970 = vrot.slane %v966, %v969
    %971 = vmatprep.subr.bf16.mxu0 0
    %972 = vmatpush1.bf16.msra.mxu0 %v149
    %973 = vmatprep.subr.bf16.mxu0 0
    %974 = vmatpush1.bf16.msra.mxu0 %v150
    %975 = vmatprep.subr.bf16.mxu0 0
    %976 = vmatpush1.bf16.msra.mxu0 %v151
    %977 = vmatprep.subr.bf16.mxu0 0
    %978 = vmatpush1.bf16.msra.mxu0 %v152
    %979 = vmatprep.subr.bf16.mxu0 0
    %980 = vmatpush1.bf16.msra.mxu0 %v153
    %981 = vmatprep.subr.bf16.mxu0 0
    %982 = vmatpush1.bf16.msra.mxu0 %v154
    %983 = vmatprep.subr.bf16.mxu0 0
    %984 = vmatpush1.bf16.msra.mxu0 %v155
    %985 = vmatprep.subr.bf16.mxu0 0
    %986 = vmatpush1.bf16.msra.mxu0 %v156
    %987 = vmatprep.subr.bf16.mxu0 0
    %988 = vmatpush1.bf16.msra.mxu0 0
    %989 = vmatprep.subr.bf16.mxu0 0
    %990 = vmatpush1.bf16.msra.mxu0 0
    %991 = vmatprep.subr.bf16.mxu0 0
    %992 = vmatpush1.bf16.msra.mxu0 0
    %993 = vmatprep.subr.bf16.mxu0 0
    %994 = vmatpush1.bf16.msra.mxu0 0
    %995 = vmatprep.subr.bf16.mxu0 0
    %996 = vmatpush1.bf16.msra.mxu0 0
    %997 = vmatprep.subr.bf16.mxu0 0
    %998 = vmatpush1.bf16.msra.mxu0 0
    %999 = vmatprep.subr.bf16.mxu0 0
    %1000 = vmatpush1.bf16.msra.mxu0 0
    %1001 = vmatprep.subr.bf16.mxu0 0
    %1002 = vmatpush1.bf16.msra.mxu0 0
    %1003 = vmatprep.mubr.bf16.mxu0 0
    %1004 = vmatmul.mubr.bf16.gmra.mrb[0].mxu0 %v965
    %v1005 = vpop.f32.mrb[0].mxu0
    %v1006 = vadd.f32 %v970, %v1005
    %v1007 = vpop.f32.mrb[0].mxu0
    %v1008 = vpop.f32.mrb[0].mxu0
    %v1009 = vpop.f32.mrb[0].mxu0
    %1010 = vdwg.mxu0
    %s1011 = sld [smem:[#allocation2 + $0x27]]
    %s1012 = sld [smem:[#allocation2 + $0x28]]
    %s1013 = sld [smem:[#allocation2 + $0x29]]
    %v1014 = vmax.f32 %v1006, -1.0
    %v1015 = vmin.f32 %v1014, 1.0
    %v1016 = vstv %s1011
    %v1017 = vmul.f32 %v1016, %v1015
    %v1018 = vstv %s1012
    %v1019 = vmul.f32 %v1018, %v964
    %v1020 = vadd.f32 %v1017, %v1019
    %s1021 = scalar_lea.vmem [#allocation10], 104
    %v1022 = vld [vmem:[%s1021] sm:$0xff]
    %v1023 = vstv %s1013
    %v1024 = vmul.f32 %v1023, %v1022
    %v1025 = vadd.f32 %v1020, %v1024
    %v1026 = vsel %vm219, %v93, %v1025
    %v1027 = vpack.c.bf16 %v1026, %v1026
    %v1028 = vld [vmem:[#allocation9 + $0xe] sm:$0x1]
    %v1029 = vlaneseq
    %v1030 = vshrl.u32 %v1029, 7
    %v1031 = vsub.s32 0, %v1030
    %v1032 = vrot.slane %v1028, %v1031
    %1033 = vmatprep.subr.bf16.mxu0 0
    %1034 = vmatpush1.bf16.msra.mxu0 %v149
    %1035 = vmatprep.subr.bf16.mxu0 0
    %1036 = vmatpush1.bf16.msra.mxu0 %v150
    %1037 = vmatprep.subr.bf16.mxu0 0
    %1038 = vmatpush1.bf16.msra.mxu0 %v151
    %1039 = vmatprep.subr.bf16.mxu0 0
    %1040 = vmatpush1.bf16.msra.mxu0 %v152
    %1041 = vmatprep.subr.bf16.mxu0 0
    %1042 = vmatpush1.bf16.msra.mxu0 %v153
    %1043 = vmatprep.subr.bf16.mxu0 0
    %1044 = vmatpush1.bf16.msra.mxu0 %v154
    %1045 = vmatprep.subr.bf16.mxu0 0
    %1046 = vmatpush1.bf16.msra.mxu0 %v155
    %1047 = vmatprep.subr.bf16.mxu0 0
    %1048 = vmatpush1.bf16.msra.mxu0 %v156
    %1049 = vmatprep.subr.bf16.mxu0 0
    %1050 = vmatpush1.bf16.msra.mxu0 0
    %1051 = vmatprep.subr.bf16.mxu0 0
    %1052 = vmatpush1.bf16.msra.mxu0 0
    %1053 = vmatprep.subr.bf16.mxu0 0
    %1054 = vmatpush1.bf16.msra.mxu0 0
    %1055 = vmatprep.subr.bf16.mxu0 0
    %1056 = vmatpush1.bf16.msra.mxu0 0
    %1057 = vmatprep.subr.bf16.mxu0 0
    %1058 = vmatpush1.bf16.msra.mxu0 0
    %1059 = vmatprep.subr.bf16.mxu0 0
    %1060 = vmatpush1.bf16.msra.mxu0 0
    %1061 = vmatprep.subr.bf16.mxu0 0
    %1062 = vmatpush1.bf16.msra.mxu0 0
    %1063 = vmatprep.subr.bf16.mxu0 0
    %1064 = vmatpush1.bf16.msra.mxu0 0
    %1065 = vmatprep.mubr.bf16.mxu0 0
    %1066 = vmatmul.mubr.bf16.gmra.mrb[0].mxu0 %v1027
    %v1067 = vpop.f32.mrb[0].mxu0
    %v1068 = vadd.f32 %v1032, %v1067
    %v1069 = vpop.f32.mrb[0].mxu0
    %v1070 = vpop.f32.mrb[0].mxu0
    %v1071 = vpop.f32.mrb[0].mxu0
    %1072 = vdwg.mxu0
    %s1073 = sld [smem:[#allocation2 + $0x2a]]
    %s1074 = sld [smem:[#allocation2 + $0x2b]]
    %s1075 = sld [smem:[#allocation2 + $0x2c]]
    %v1076 = vmax.f32 %v1068, -1.0
    %v1077 = vmin.f32 %v1076, 1.0
    %v1078 = vstv %s1073
    %v1079 = vmul.f32 %v1078, %v1077
    %v1080 = vstv %s1074
    %v1081 = vmul.f32 %v1080, %v1026
    %v1082 = vadd.f32 %v1079, %v1081
    %s1083 = scalar_lea.vmem [#allocation10], 112
    %v1084 = vld [vmem:[%s1083] sm:$0xff]
    %v1085 = vstv %s1075
    %v1086 = vmul.f32 %v1085, %v1084
    %v1087 = vadd.f32 %v1082, %v1086
    %v1088 = vsel %vm219, %v93, %v1087
    %v1089 = vpack.c.bf16 %v1088, %v1088
    %v1090 = vld [vmem:[#allocation9 + $0xf] sm:$0x1]
    %v1091 = vlaneseq
    %v1092 = vshrl.u32 %v1091, 7
    %v1093 = vsub.s32 0, %v1092
    %v1094 = vrot.slane %v1090, %v1093
    %1095 = vmatprep.subr.bf16.mxu0 0
    %1096 = vmatpush1.bf16.msra.mxu0 %v149
    %1097 = vmatprep.subr.bf16.mxu0 0
    %1098 = vmatpush1.bf16.msra.mxu0 %v150
    %1099 = vmatprep.subr.bf16.mxu0 0
    %1100 = vmatpush1.bf16.msra.mxu0 %v151
    %1101 = vmatprep.subr.bf16.mxu0 0
    %1102 = vmatpush1.bf16.msra.mxu0 %v152
    %1103 = vmatprep.subr.bf16.mxu0 0
    %1104 = vmatpush1.bf16.msra.mxu0 %v153
    %1105 = vmatprep.subr.bf16.mxu0 0
    %1106 = vmatpush1.bf16.msra.mxu0 %v154
    %1107 = vmatprep.subr.bf16.mxu0 0
    %1108 = vmatpush1.bf16.msra.mxu0 %v155
    %1109 = vmatprep.subr.bf16.mxu0 0
    %1110 = vmatpush1.bf16.msra.mxu0 %v156
    %1111 = vmatprep.subr.bf16.mxu0 0
    %1112 = vmatpush1.bf16.msra.mxu0 0
    %1113 = vmatprep.subr.bf16.mxu0 0
    %1114 = vmatpush1.bf16.msra.mxu0 0
    %1115 = vmatprep.subr.bf16.mxu0 0
    %1116 = vmatpush1.bf16.msra.mxu0 0
    %1117 = vmatprep.subr.bf16.mxu0 0
    %1118 = vmatpush1.bf16.msra.mxu0 0
    %1119 = vmatprep.subr.bf16.mxu0 0
    %1120 = vmatpush1.bf16.msra.mxu0 0
    %1121 = vmatprep.subr.bf16.mxu0 0
    %1122 = vmatpush1.bf16.msra.mxu0 0
    %1123 = vmatprep.subr.bf16.mxu0 0
    %1124 = vmatpush1.bf16.msra.mxu0 0
    %1125 = vmatprep.subr.bf16.mxu0 0
    %1126 = vmatpush1.bf16.msra.mxu0 0
    %1127 = vmatprep.mubr.bf16.mxu0 0
    %1128 = vmatmul.mubr.bf16.gmra.mrb[0].mxu0 %v1089
    %v1129 = vpop.f32.mrb[0].mxu0
    %v1130 = vadd.f32 %v1094, %v1129
    %v1131 = vpop.f32.mrb[0].mxu0
    %v1132 = vpop.f32.mrb[0].mxu0
    %v1133 = vpop.f32.mrb[0].mxu0
    %1134 = vdwg.mxu0
    %s1135 = sld [smem:[#allocation2 + $0x2d]]
    %s1136 = sld [smem:[#allocation2 + $0x2e]]
    %s1137 = sld [smem:[#allocation2 + $0x2f]]
    %v1138 = vmax.f32 %v1130, -1.0
    %v1139 = vmin.f32 %v1138, 1.0
    %v1140 = vstv %s1135
    %v1141 = vmul.f32 %v1140, %v1139
    %v1142 = vstv %s1136
    %v1143 = vmul.f32 %v1142, %v1088
    %v1144 = vadd.f32 %v1141, %v1143
    %s1145 = scalar_lea.vmem [#allocation10], 120
    %v1146 = vld [vmem:[%s1145] sm:$0xff]
    %v1147 = vstv %s1137
    %v1148 = vmul.f32 %v1147, %v1146
    %v1149 = vadd.f32 %v1144, %v1148
    %v1150 = vsel %vm219, %v93, %v1149
    %v1151 = vpack.c.bf16 %v1150, %v1150
    %v1152 = vld [vmem:[#allocation9 + $0x10] sm:$0x1]
    %v1153 = vlaneseq
    %v1154 = vshrl.u32 %v1153, 7
    %v1155 = vsub.s32 0, %v1154
    %v1156 = vrot.slane %v1152, %v1155
    %1157 = vmatprep.subr.bf16.mxu0 0
    %1158 = vmatpush1.bf16.msra.mxu0 %v149
    %1159 = vmatprep.subr.bf16.mxu0 0
    %1160 = vmatpush1.bf16.msra.mxu0 %v150
    %1161 = vmatprep.subr.bf16.mxu0 0
    %1162 = vmatpush1.bf16.msra.mxu0 %v151
    %1163 = vmatprep.subr.bf16.mxu0 0
    %1164 = vmatpush1.bf16.msra.mxu0 %v152
    %1165 = vmatprep.subr.bf16.mxu0 0
    %1166 = vmatpush1.bf16.msra.mxu0 %v153
    %1167 = vmatprep.subr.bf16.mxu0 0
    %1168 = vmatpush1.bf16.msra.mxu0 %v154
    %1169 = vmatprep.subr.bf16.mxu0 0
    %1170 = vmatpush1.bf16.msra.mxu0 %v155
    %1171 = vmatprep.subr.bf16.mxu0 0
    %1172 = vmatpush1.bf16.msra.mxu0 %v156
    %1173 = vmatprep.subr.bf16.mxu0 0
    %1174 = vmatpush1.bf16.msra.mxu0 0
    %1175 = vmatprep.subr.bf16.mxu0 0
    %1176 = vmatpush1.bf16.msra.mxu0 0
    %1177 = vmatprep.subr.bf16.mxu0 0
    %1178 = vmatpush1.bf16.msra.mxu0 0
    %1179 = vmatprep.subr.bf16.mxu0 0
    %1180 = vmatpush1.bf16.msra.mxu0 0
    %1181 = vmatprep.subr.bf16.mxu0 0
    %1182 = vmatpush1.bf16.msra.mxu0 0
    %1183 = vmatprep.subr.bf16.mxu0 0
    %1184 = vmatpush1.bf16.msra.mxu0 0
    %1185 = vmatprep.subr.bf16.mxu0 0
    %1186 = vmatpush1.bf16.msra.mxu0 0
    %1187 = vmatprep.subr.bf16.mxu0 0
    %1188 = vmatpush1.bf16.msra.mxu0 0
    %1189 = vmatprep.mubr.bf16.mxu0 0
    %1190 = vmatmul.mubr.bf16.gmra.mrb[0].mxu0 %v1151
    %v1191 = vpop.f32.mrb[0].mxu0
    %v1192 = vadd.f32 %v1156, %v1191
    %v1193 = vpop.f32.mrb[0].mxu0
    %v1194 = vpop.f32.mrb[0].mxu0
    %v1195 = vpop.f32.mrb[0].mxu0
    %1196 = vdwg.mxu0
    %s1197 = sld [smem:[#allocation2 + $0x30]]
    %s1198 = sld [smem:[#allocation2 + $0x31]]
    %s1199 = sld [smem:[#allocation2 + $0x32]]
    %v1200 = vmax.f32 %v1192, -1.0
    %v1201 = vmin.f32 %v1200, 1.0
    %v1202 = vstv %s1197
    %v1203 = vmul.f32 %v1202, %v1201
    %v1204 = vstv %s1198
    %v1205 = vmul.f32 %v1204, %v1150
    %v1206 = vadd.f32 %v1203, %v1205
    %s1207 = scalar_lea.vmem [#allocation10], 128
    %v1208 = vld [vmem:[%s1207] sm:$0xff]
    %v1209 = vstv %s1199
    %v1210 = vmul.f32 %v1209, %v1208
    %v1211 = vadd.f32 %v1206, %v1210
    %v1212 = vsel %vm219, %v93, %v1211
    %v1213 = vpack.c.bf16 %v1212, %v1212
    %v1214 = vld [vmem:[#allocation9 + $0x11] sm:$0x1]
    %v1215 = vlaneseq
    %v1216 = vshrl.u32 %v1215, 7
    %v1217 = vsub.s32 0, %v1216
    %v1218 = vrot.slane %v1214, %v1217
    %1219 = vmatprep.subr.bf16.mxu0 0
    %1220 = vmatpush1.bf16.msra.mxu0 %v149
    %1221 = vmatprep.subr.bf16.mxu0 0
    %1222 = vmatpush1.bf16.msra.mxu0 %v150
    %1223 = vmatprep.subr.bf16.mxu0 0
    %1224 = vmatpush1.bf16.msra.mxu0 %v151
    %1225 = vmatprep.subr.bf16.mxu0 0
    %1226 = vmatpush1.bf16.msra.mxu0 %v152
    %1227 = vmatprep.subr.bf16.mxu0 0
    %1228 = vmatpush1.bf16.msra.mxu0 %v153
    %1229 = vmatprep.subr.bf16.mxu0 0
    %1230 = vmatpush1.bf16.msra.mxu0 %v154
    %1231 = vmatprep.subr.bf16.mxu0 0
    %1232 = vmatpush1.bf16.msra.mxu0 %v155
    %1233 = vmatprep.subr.bf16.mxu0 0
    %1234 = vmatpush1.bf16.msra.mxu0 %v156
    %1235 = vmatprep.subr.bf16.mxu0 0
    %1236 = vmatpush1.bf16.msra.mxu0 0
    %1237 = vmatprep.subr.bf16.mxu0 0
    %1238 = vmatpush1.bf16.msra.mxu0 0
    %1239 = vmatprep.subr.bf16.mxu0 0
    %1240 = vmatpush1.bf16.msra.mxu0 0
    %1241 = vmatprep.subr.bf16.mxu0 0
    %1242 = vmatpush1.bf16.msra.mxu0 0
    %1243 = vmatprep.subr.bf16.mxu0 0
    %1244 = vmatpush1.bf16.msra.mxu0 0
    %1245 = vmatprep.subr.bf16.mxu0 0
    %1246 = vmatpush1.bf16.msra.mxu0 0
    %1247 = vmatprep.subr.bf16.mxu0 0
    %1248 = vmatpush1.bf16.msra.mxu0 0
    %1249 = vmatprep.subr.bf16.mxu0 0
    %1250 = vmatpush1.bf16.msra.mxu0 0
    %1251 = vmatprep.mubr.bf16.mxu0 0
    %1252 = vmatmul.mubr.bf16.gmra.mrb[0].mxu0 %v1213
    %v1253 = vpop.f32.mrb[0].mxu0
    %v1254 = vadd.f32 %v1218, %v1253
    %v1255 = vpop.f32.mrb[0].mxu0
    %v1256 = vpop.f32.mrb[0].mxu0
    %v1257 = vpop.f32.mrb[0].mxu0
    %1258 = vdwg.mxu0
    %s1259 = sld [smem:[#allocation2 + $0x33]]
    %s1260 = sld [smem:[#allocation2 + $0x34]]
    %s1261 = sld [smem:[#allocation2 + $0x35]]
    %v1262 = vmax.f32 %v1254, -1.0
    %v1263 = vmin.f32 %v1262, 1.0
    %v1264 = vstv %s1259
    %v1265 = vmul.f32 %v1264, %v1263
    %v1266 = vstv %s1260
    %v1267 = vmul.f32 %v1266, %v1212
    %v1268 = vadd.f32 %v1265, %v1267
    %s1269 = scalar_lea.vmem [#allocation10], 136
    %v1270 = vld [vmem:[%s1269] sm:$0xff]
    %v1271 = vstv %s1261
    %v1272 = vmul.f32 %v1271, %v1270
    %v1273 = vadd.f32 %v1268, %v1272
    %v1274 = vsel %vm219, %v93, %v1273
    %v1275 = vpack.c.bf16 %v1274, %v1274
    %v1276 = vld [vmem:[#allocation9 + $0x12] sm:$0x1]
    %v1277 = vlaneseq
    %v1278 = vshrl.u32 %v1277, 7
    %v1279 = vsub.s32 0, %v1278
    %v1280 = vrot.slane %v1276, %v1279
    %1281 = vmatprep.subr.bf16.mxu0 0
    %1282 = vmatpush1.bf16.msra.mxu0 %v149
    %1283 = vmatprep.subr.bf16.mxu0 0
    %1284 = vmatpush1.bf16.msra.mxu0 %v150
    %1285 = vmatprep.subr.bf16.mxu0 0
    %1286 = vmatpush1.bf16.msra.mxu0 %v151
    %1287 = vmatprep.subr.bf16.mxu0 0
    %1288 = vmatpush1.bf16.msra.mxu0 %v152
    %1289 = vmatprep.subr.bf16.mxu0 0
    %1290 = vmatpush1.bf16.msra.mxu0 %v153
    %1291 = vmatprep.subr.bf16.mxu0 0
    %1292 = vmatpush1.bf16.msra.mxu0 %v154
    %1293 = vmatprep.subr.bf16.mxu0 0
    %1294 = vmatpush1.bf16.msra.mxu0 %v155
    %1295 = vmatprep.subr.bf16.mxu0 0
    %1296 = vmatpush1.bf16.msra.mxu0 %v156
    %1297 = vmatprep.subr.bf16.mxu0 0
    %1298 = vmatpush1.bf16.msra.mxu0 0
    %1299 = vmatprep.subr.bf16.mxu0 0
    %1300 = vmatpush1.bf16.msra.mxu0 0
    %1301 = vmatprep.subr.bf16.mxu0 0
    %1302 = vmatpush1.bf16.msra.mxu0 0
    %1303 = vmatprep.subr.bf16.mxu0 0
    %1304 = vmatpush1.bf16.msra.mxu0 0
    %1305 = vmatprep.subr.bf16.mxu0 0
    %1306 = vmatpush1.bf16.msra.mxu0 0
    %1307 = vmatprep.subr.bf16.mxu0 0
    %1308 = vmatpush1.bf16.msra.mxu0 0
    %1309 = vmatprep.subr.bf16.mxu0 0
    %1310 = vmatpush1.bf16.msra.mxu0 0
    %1311 = vmatprep.subr.bf16.mxu0 0
    %1312 = vmatpush1.bf16.msra.mxu0 0
    %1313 = vmatprep.mubr.bf16.mxu0 0
    %1314 = vmatmul.mubr.bf16.gmra.mrb[0].mxu0 %v1275
    %v1315 = vpop.f32.mrb[0].mxu0
    %v1316 = vadd.f32 %v1280, %v1315
    %v1317 = vpop.f32.mrb[0].mxu0
    %v1318 = vpop.f32.mrb[0].mxu0
    %v1319 = vpop.f32.mrb[0].mxu0
    %1320 = vdwg.mxu0
    %s1321 = sld [smem:[#allocation2 + $0x36]]
    %s1322 = sld [smem:[#allocation2 + $0x37]]
    %s1323 = sld [smem:[#allocation2 + $0x38]]
    %v1324 = vmax.f32 %v1316, -1.0
    %v1325 = vmin.f32 %v1324, 1.0
    %v1326 = vstv %s1321
    %v1327 = vmul.f32 %v1326, %v1325
    %v1328 = vstv %s1322
    %v1329 = vmul.f32 %v1328, %v1274
    %v1330 = vadd.f32 %v1327, %v1329
    %s1331 = scalar_lea.vmem [#allocation10], 144
    %v1332 = vld [vmem:[%s1331] sm:$0xff]
    %v1333 = vstv %s1323
    %v1334 = vmul.f32 %v1333, %v1332
    %v1335 = vadd.f32 %v1330, %v1334
    %v1336 = vsel %vm219, %v93, %v1335
    %v1337 = vpack.c.bf16 %v1336, %v1336
    %v1338 = vld [vmem:[#allocation9 + $0x13] sm:$0x1]
    %v1339 = vlaneseq
    %v1340 = vshrl.u32 %v1339, 7
    %v1341 = vsub.s32 0, %v1340
    %v1342 = vrot.slane %v1338, %v1341
    %1343 = vmatprep.subr.bf16.mxu0 0
    %1344 = vmatpush1.bf16.msra.mxu0 %v149
    %1345 = vmatprep.subr.bf16.mxu0 0
    %1346 = vmatpush1.bf16.msra.mxu0 %v150
    %1347 = vmatprep.subr.bf16.mxu0 0
    %1348 = vmatpush1.bf16.msra.mxu0 %v151
    %1349 = vmatprep.subr.bf16.mxu0 0
    %1350 = vmatpush1.bf16.msra.mxu0 %v152
    %1351 = vmatprep.subr.bf16.mxu0 0
    %1352 = vmatpush1.bf16.msra.mxu0 %v153
    %1353 = vmatprep.subr.bf16.mxu0 0
    %1354 = vmatpush1.bf16.msra.mxu0 %v154
    %1355 = vmatprep.subr.bf16.mxu0 0
    %1356 = vmatpush1.bf16.msra.mxu0 %v155
    %1357 = vmatprep.subr.bf16.mxu0 0
    %1358 = vmatpush1.bf16.msra.mxu0 %v156
    %1359 = vmatprep.subr.bf16.mxu0 0
    %1360 = vmatpush1.bf16.msra.mxu0 0
    %1361 = vmatprep.subr.bf16.mxu0 0
    %1362 = vmatpush1.bf16.msra.mxu0 0
    %1363 = vmatprep.subr.bf16.mxu0 0
    %1364 = vmatpush1.bf16.msra.mxu0 0
    %1365 = vmatprep.subr.bf16.mxu0 0
    %1366 = vmatpush1.bf16.msra.mxu0 0
    %1367 = vmatprep.subr.bf16.mxu0 0
    %1368 = vmatpush1.bf16.msra.mxu0 0
    %1369 = vmatprep.subr.bf16.mxu0 0
    %1370 = vmatpush1.bf16.msra.mxu0 0
    %1371 = vmatprep.subr.bf16.mxu0 0
    %1372 = vmatpush1.bf16.msra.mxu0 0
    %1373 = vmatprep.subr.bf16.mxu0 0
    %1374 = vmatpush1.bf16.msra.mxu0 0
    %1375 = vmatprep.mubr.bf16.mxu0 0
    %1376 = vmatmul.mubr.bf16.gmra.mrb[0].mxu0 %v1337
    %v1377 = vpop.f32.mrb[0].mxu0
    %v1378 = vadd.f32 %v1342, %v1377
    %v1379 = vpop.f32.mrb[0].mxu0
    %v1380 = vpop.f32.mrb[0].mxu0
    %v1381 = vpop.f32.mrb[0].mxu0
    %1382 = vdwg.mxu0
    %s1383 = sld [smem:[#allocation2 + $0x39]]
    %s1384 = sld [smem:[#allocation2 + $0x3a]]
    %s1385 = sld [smem:[#allocation2 + $0x3b]]
    %v1386 = vmax.f32 %v1378, -1.0
    %v1387 = vmin.f32 %v1386, 1.0
    %v1388 = vstv %s1383
    %v1389 = vmul.f32 %v1388, %v1387
    %v1390 = vstv %s1384
    %v1391 = vmul.f32 %v1390, %v1336
    %v1392 = vadd.f32 %v1389, %v1391
    %s1393 = scalar_lea.vmem [#allocation10], 152
    %v1394 = vld [vmem:[%s1393] sm:$0xff]
    %v1395 = vstv %s1385
    %v1396 = vmul.f32 %v1395, %v1394
    %v1397 = vadd.f32 %v1392, %v1396
    %v1398 = vsel %vm219, %v93, %v1397
    %1399 = vst [vmem:[#allocation12] sm:$0xff] %v1398
    // Predicated region
    $region50: #{ddpm_reverse_pallas.1} parent=1 // pred_check
      _
    $region51: #{ddpm_reverse_pallas.1} parent=1 // pred_check_branch
      %1401 = sbr.rel (0) target = $region53
    $region52: #{ddpm_reverse_pallas.1} parent=1 // pred_region
      %s1403 = ssub.s32 128, 128
      %1404 = vsyncadd [#allocation4], %s1403
      %s1406 = sshll.u32 [#allocation12], 4
      %s1407 = int_to_ptr.vmem [resolvable:$true] %s1406
      %1409 = dma.vmem_to_hbm [thread:$0]  %s1407, 128, %s7, [#allocation4]
    $region53: #{ddpm_reverse_pallas.1} parent=1 // pred_fallthru
      _
    // Predicated region
    $region54: #{ddpm_reverse_pallas.1} parent=1 // pred_check
      _
    $region55: #{ddpm_reverse_pallas.1} parent=1 // pred_check_branch
      %1411 = sbr.rel (0) target = $region57
    $region56: #{ddpm_reverse_pallas.1} parent=1 // pred_region
      %1412 = dma.done [#allocation4], 128
    $region57: #{ddpm_reverse_pallas.1} parent=1 // pred_fallthru
      _
    %1413 = vsyncpa [#allocation3], 1
    %1414 = vsyncpa [#allocation8], 1
    %1415 = vsyncpa [#allocation11], 1
    %1416 = vsyncpa [#allocation4], 1
    %1417 = vsyncpa [#allocation5], 1

</llo_original>
